<compile_context>
chip_gen: v7x
topology: tpu7x:2x2x1
jax: 0.10.0
libtpu: 0.0.40
codegen_flags: <defaults>
</compile_context>

<pallas_src>
import functools

import jax
import jax.numpy as jnp
from jax.experimental import pallas as pl
from jax.experimental.pallas import tpu as pltpu

_LANE = 128
_SUBLANE_BF16 = 16       # bf16 packs two rows per sublane -> 16-row granularity
_FC4_CHUNK = 128         # lane chunk for the fused fc4->fc5 accumulation


def _round_up(x, m):
    return (x + m - 1) // m * m


# ----------------------------------------------------------------------------
# Kernel
# ----------------------------------------------------------------------------
def _gmmn_kernel(x_ref,
                 w1_ref, b1_ref,
                 w2_ref, b2_ref,
                 w3_ref, b3_ref,
                 w4_ref, b4_ref,
                 w5_ref, b5_ref,
                 o_ref):
    def dense_relu(h_bf16, w_ref, b_ref):
        # MXU matmul in bf16 with f32 accumulation; bias add + ReLU in f32.
        acc = jnp.dot(h_bf16, w_ref[...], preferred_element_type=jnp.float32)
        return jnp.maximum(acc + b_ref[...], 0.0)

    h = x_ref[...]                                              # bf16 [tile, 128]
    h = dense_relu(h, w1_ref, b1_ref).astype(jnp.bfloat16)      # [tile, 128]
    h = dense_relu(h, w2_ref, b2_ref).astype(jnp.bfloat16)      # [tile, 256]
    h3 = dense_relu(h, w3_ref, b3_ref).astype(jnp.bfloat16)     # [tile, 256]

    # fc4 -> fc5 fused over 128-lane chunks of the 896-wide hidden dim so the
    # [tile, 896] f32 h4 is never materialized in VMEM.
    tile = h3.shape[0]
    n_hidden_p = w4_ref.shape[1]        # 896
    n_out_p = w5_ref.shape[1]           # 128
    acc = jnp.zeros((tile, n_out_p), jnp.float32)
    for lo in range(0, n_hidden_p, _FC4_CHUNK):
        hi = lo + _FC4_CHUNK
        h4c = jnp.dot(h3, w4_ref[:, lo:hi], preferred_element_type=jnp.float32)
        h4c = jnp.maximum(h4c + b4_ref[:, lo:hi], 0.0).astype(jnp.bfloat16)
        acc = acc + jnp.dot(h4c, w5_ref[lo:hi, :],
                            preferred_element_type=jnp.float32)

    z = acc + b5_ref[...]
    # sigmoid: exp and approximate reciprocal both run on the EUP slot.
    out = pl.reciprocal(1.0 + jnp.exp(-z), approx=True)
    o_ref[...] = out.astype(o_ref.dtype)


# ----------------------------------------------------------------------------
# Capability probe: single-buffered (Buffered(1)) constant blocks.
# ----------------------------------------------------------------------------
_BUFFERED_ONE_OK = None


def _buffered_one_supported():
    """Probe once whether pipeline_mode=pl.Buffered(1) for grid-invariant blocks
    is accepted and correct on this JAX/Mosaic install; fall back otherwise."""
    global _BUFFERED_ONE_OK
    if _BUFFERED_ONE_OK is not None:
        return _BUFFERED_ONE_OK
    try:
        def _probe_kernel(x_ref, o_ref):
            o_ref[...] = x_ref[...] * 2.0

        probe = pl.pallas_call(
            _probe_kernel,
            out_shape=jax.ShapeDtypeStruct((16, 128), jnp.float32),
            grid=(2,),
            in_specs=[pl.BlockSpec((8, 128), lambda i: (0, 0),
                                   pipeline_mode=pl.Buffered(1))],
            out_specs=pl.BlockSpec((8, 128), lambda i: (i, 0)),
        )
        y = jax.jit(probe)(jnp.full((8, 128), 3.0, jnp.float32))
        _BUFFERED_ONE_OK = bool(jnp.all(y == 6.0))
    except Exception:
        _BUFFERED_ONE_OK = False
    return _BUFFERED_ONE_OK


# ----------------------------------------------------------------------------
# Tiling decisions
# ----------------------------------------------------------------------------
def _num_tensorcores():
    """2 on v7x (two TensorCores per chip), else 1 (v5e/v6e)."""
    try:
        kind = jax.devices()[0].device_kind.lower()
    except Exception:
        return 1
    return 2 if ("v7" in kind or kind.startswith("tpu7")) else 1


def _pick_tile(batch, batch_tile, num_tc):
    b_min = _round_up(batch, _SUBLANE_BF16)
    tile = max(_SUBLANE_BF16, min(int(batch_tile), b_min))
    if num_tc > 1 and b_min >= num_tc * _SUBLANE_BF16:
        # Ensure grid >= num_tc so the "parallel" batch axis shards across all
        # TensorCores (v7x); irrelevant on single-core chips.
        per_core = -(-batch // num_tc)
        tile = min(tile, _round_up(per_core, _SUBLANE_BF16))
    return _round_up(tile, _SUBLANE_BF16)


# ----------------------------------------------------------------------------
# Forward pass
# ----------------------------------------------------------------------------
@functools.partial(jax.jit, static_argnames=("tile", "use_buffered"))
def _gmmn_forward_impl(samples, params, *, tile, use_buffered):
    B, n_start = samples.shape
    n_out = params["w5"].shape[1]

    b_padded = _round_up(B, tile)
    n_start_p = _round_up(n_start, _LANE)

    # --- pad the batch rows and the input lanes (zero rows/lanes are exact) --
    x = jnp.pad(samples.astype(jnp.bfloat16),
                ((0, b_padded - B), (0, n_start_p - n_start)))

    # --- pad layer widths to lane multiples, cast weights to bf16 ------------
    # Zero W columns + zero bias -> relu(0)=0, and the matching zero input rows
    # of the next layer contribute nothing, so padding is mathematically exact.
    w_list, b_list = [], []
    in_pad = n_start_p - n_start
    for idx in range(1, 6):
        w = params[f"w{idx}"]
        b = params[f"b{idx}"]
        out_pad = _round_up(w.shape[1], _LANE) - w.shape[1]
        w_list.append(jnp.pad(w, ((0, in_pad), (0, out_pad))).astype(jnp.bfloat16))
        b_list.append(jnp.pad(b, ((0, 0), (0, out_pad))).astype(jnp.float32))
        in_pad = out_pad
    n_out_p = w_list[-1].shape[1]

    # --- BlockSpecs -----------------------------------------------------------
    x_spec = pl.BlockSpec((tile, n_start_p), lambda i: (i, 0))
    if use_buffered:
        # Grid-invariant weight/bias blocks: single-buffer to save VMEM.
        def const_spec(shape):
            return pl.BlockSpec(shape, lambda i: (0, 0),
                                pipeline_mode=pl.Buffered(1))
    else:
        def const_spec(shape):
            return pl.BlockSpec(shape, lambda i: (0, 0))

    in_specs = [x_spec]
    args = [x]
    for w, b in zip(w_list, b_list):
        in_specs += [const_spec(w.shape), const_spec(b.shape)]
        args += [w, b]

    # --- cost estimate from the true (unpadded) dims; weights read once ------
    flops = 2 * B * sum(params[f"w{i}"].shape[0] * params[f"w{i}"].shape[1]
                        for i in range(1, 6))
    bytes_accessed = (B * n_start * 2
                      + sum(params[f"w{i}"].size * 2 for i in range(1, 6))
                      + sum(params[f"b{i}"].size * 4 for i in range(1, 6))
                      + B * n_out * 4)

    out = pl.pallas_call(
        _gmmn_kernel,
        out_shape=jax.ShapeDtypeStruct((b_padded, n_out_p), jnp.float32),
        grid_spec=pltpu.PrefetchScalarGridSpec(
            num_scalar_prefetch=0,
            grid=(b_padded // tile,),
            in_specs=in_specs,
            out_specs=pl.BlockSpec((tile, n_out_p), lambda i: (i, 0)),
        ),
        compiler_params=pltpu.CompilerParams(
            dimension_semantics=("parallel",),
            # Only needed when the tile is large enough to approach v5e's
            # 16 MiB default scoped-VMEM limit; default tile (512) stays under.
            vmem_limit_bytes=(64 * 1024 * 1024) if tile >= 1024 else None,
        ),
        cost_estimate=pl.CostEstimate(
            flops=flops,
            transcendentals=2 * B * n_out,
            bytes_accessed=bytes_accessed,
        ),
    )(*args)

    # Strip batch padding and lane padding of the final layer.
    return out[:B, :n_out]


def gmmn_forward(samples, params, batch_tile=512):
    """Fused GMMN forward.

    samples: [B, n_start] float32.
    params:  dict with w1..w5 stored as [in, out] (transposed vs PyTorch's
             nn.Linear [out, in]) and b1..b5 as [1, out], float32.
    """
    tile = _pick_tile(samples.shape[0], batch_tile, _num_tensorcores())
    return _gmmn_forward_impl(samples, params, tile=tile,
                              use_buffered=_buffered_one_supported())


# ----------------------------------------------------------------------------
# Params / reference
# ----------------------------------------------------------------------------
def init_gmmn_params(key, n_start, n_out):
    """PyTorch nn.Linear-style init; weights stored transposed as [in, out]."""
    dims = [(n_start, 64), (64, 256), (256, 256), (256, 784), (784, n_out)]
    params = {}
    for idx, (d_in, d_out) in enumerate(dims, start=1):
        key, kw, kb = jax.random.split(key, 3)
        bound = 1.0 / float(d_in) ** 0.5
        params[f"w{idx}"] = jax.random.uniform(
            kw, (d_in, d_out), jnp.float32, minval=-bound, maxval=bound)
        params[f"b{idx}"] = jax.random.uniform(
            kb, (1, d_out), jnp.float32, minval=-bound, maxval=bound)
    return params


def gmmn_reference(samples, params):
    """Plain-JAX reference using the same bf16-matmul / f32-accumulate math."""
    h = samples
    for idx in range(1, 6):
        w = params[f"w{idx}"].astype(jnp.bfloat16)
        z = jnp.dot(h.astype(jnp.bfloat16), w,
                    preferred_element_type=jnp.float32) + params[f"b{idx}"]
        h = jnp.maximum(z, 0.0) if idx < 5 else 1.0 / (1.0 + jnp.exp(-z))
    return h


if __name__ == "__main__":
    key = jax.random.PRNGKey(0)
    n_start, n_out = 32, 64
    k_params, k_x = jax.random.split(key)
    params = init_gmmn_params(k_params, n_start, n_out)

    # 1) Small batch: single grid step, tile clamps down to 16.
    samples = jax.random.normal(k_x, (16, n_start), jnp.float32)
    out = jax.block_until_ready(gmmn_forward(samples, params))
    ref = gmmn_reference(samples, params)
    assert out.shape == (16, n_out)
    assert float(jnp.max(jnp.abs(out - ref))) < 1e-2, "mismatch vs reference"

    # 2) Multi-tile path: batch not a multiple of the tile, grid > 1.
    samples2 = jax.random.normal(k_x, (40, n_start), jnp.float32)
    out2 = jax.block_until_ready(gmmn_forward(samples2, params, batch_tile=16))
    ref2 = gmmn_reference(samples2, params)
    assert out2.shape == (40, n_out)
    assert float(jnp.max(jnp.abs(out2 - ref2))) < 1e-2, "mismatch (tiled)"

    # 3) Default (large) batch tile with batch padding and grid >= 2.
    samples3 = jax.random.normal(k_x, (600, n_start), jnp.float32)
    out3 = jax.block_until_ready(gmmn_forward(samples3, params))
    ref3 = gmmn_reference(samples3, params)
    assert out3.shape == (600, n_out)
    assert float(jnp.max(jnp.abs(out3 - ref3))) < 1e-2, "mismatch (large batch)"

    print("KERNEL_OK")
</pallas_src>

<mosaic_0001>
module attributes {stable_mosaic.version = 11 : i64} {
  func.func @_probe_kernel(%arg0: i32, %arg1: memref<8x128xf32, #tpu.memory_space<vmem>>, %arg2: memref<8x128xf32, #tpu.memory_space<vmem>>) attributes {dimension_semantics = [#tpu.dimension_semantics<arbitrary>], iteration_bounds = array<i64: 2>, scalar_prefetch = 0 : i64, scratch_operands = 0 : i64, tpu.core_type = #tpu.core_type<tc>, window_params = [{pipeline_mode = #tpu.pipeline_mode<synchronous>, transform_indices = @transform_0, window_bounds = array<i64: 8, 128>}, {transform_indices = @transform_1, window_bounds = array<i64: 8, 128>}]} {
    %c0 = arith.constant 0 : index
    %c0_0 = arith.constant 0 : index
    %0 = vector.load %arg1[%c0, %c0_0] : memref<8x128xf32, #tpu.memory_space<vmem>>, vector<8x128xf32>
    %cst = arith.constant 2.000000e+00 : f32
    %1 = vector.broadcast %cst : f32 to vector<8x128xf32>
    %2 = arith.mulf %0, %1 : vector<8x128xf32>
    %c0_1 = arith.constant 0 : index
    %c0_2 = arith.constant 0 : index
    %3 = vector.load %arg2[%c0_1, %c0_2] : memref<8x128xf32, #tpu.memory_space<vmem>>, vector<8x128xf32>
    tpu.vector_store %arg2[%c0_1, %c0_2], %2 {strides = array<i32>} : memref<8x128xf32, #tpu.memory_space<vmem>>, vector<8x128xf32>,
    return
  }
  func.func @transform_0(%arg0: i32) -> (i32, i32) {
    %c0_i32 = arith.constant 0 : i32
    %c0_i32_0 = arith.constant 0 : i32
    %c0_i32_1 = arith.constant 0 : i32
    return %c0_i32, %c0_i32_0 : i32, i32
  }
  func.func @transform_1(%arg0: i32) -> (i32, i32) {
    %c0_i32 = arith.constant 0 : i32
    %c0_i32_0 = arith.constant 0 : i32
    return %arg0, %c0_i32 : i32, i32
  }
}

module attributes {stable_mosaic.version = 11 : i64} {
  func.func @_gmmn_kernel(%arg0: i32, %arg1: memref<16x128xbf16, #tpu.memory_space<vmem>>, %arg2: memref<128x128xbf16, #tpu.memory_space<vmem>>, %arg3: memref<1x128xf32, #tpu.memory_space<vmem>>, %arg4: memref<128x256xbf16, #tpu.memory_space<vmem>>, %arg5: memref<1x256xf32, #tpu.memory_space<vmem>>, %arg6: memref<256x256xbf16, #tpu.memory_space<vmem>>, %arg7: memref<1x256xf32, #tpu.memory_space<vmem>>, %arg8: memref<256x896xbf16, #tpu.memory_space<vmem>>, %arg9: memref<1x896xf32, #tpu.memory_space<vmem>>, %arg10: memref<896x128xbf16, #tpu.memory_space<vmem>>, %arg11: memref<1x128xf32, #tpu.memory_space<vmem>>, %arg12: memref<16x128xf32, #tpu.memory_space<vmem>>) attributes {dimension_semantics = [#tpu.dimension_semantics<parallel>], iteration_bounds = array<i64: 1>, scalar_prefetch = 0 : i64, scratch_operands = 0 : i64, tpu.core_type = #tpu.core_type<tc>, window_params = [{transform_indices = @transform_0, window_bounds = array<i64: 16, 128>}, {pipeline_mode = #tpu.pipeline_mode<synchronous>, transform_indices = @transform_1, window_bounds = array<i64: 128, 128>}, {pipeline_mode = #tpu.pipeline_mode<synchronous>, transform_indices = @transform_2, window_bounds = array<i64: 1, 128>}, {pipeline_mode = #tpu.pipeline_mode<synchronous>, transform_indices = @transform_3, window_bounds = array<i64: 128, 256>}, {pipeline_mode = #tpu.pipeline_mode<synchronous>, transform_indices = @transform_4, window_bounds = array<i64: 1, 256>}, {pipeline_mode = #tpu.pipeline_mode<synchronous>, transform_indices = @transform_5, window_bounds = array<i64: 256, 256>}, {pipeline_mode = #tpu.pipeline_mode<synchronous>, transform_indices = @transform_6, window_bounds = array<i64: 1, 256>}, {pipeline_mode = #tpu.pipeline_mode<synchronous>, transform_indices = @transform_7, window_bounds = array<i64: 256, 896>}, {pipeline_mode = #tpu.pipeline_mode<synchronous>, transform_indices = @transform_8, window_bounds = array<i64: 1, 896>}, {pipeline_mode = #tpu.pipeline_mode<synchronous>, transform_indices = @transform_9, window_bounds = array<i64: 896, 128>}, {pipeline_mode = #tpu.pipeline_mode<synchronous>, transform_indices = @transform_10, window_bounds = array<i64: 1, 128>}, {transform_indices = @transform_11, window_bounds = array<i64: 16, 128>}]} {
    %c0 = arith.constant 0 : index
    %c0_0 = arith.constant 0 : index
    %0 = vector.load %arg1[%c0, %c0_0] : memref<16x128xbf16, #tpu.memory_space<vmem>>, vector<16x128xbf16>
    %c0_1 = arith.constant 0 : index
    %c0_2 = arith.constant 0 : index
    %1 = vector.load %arg2[%c0_1, %c0_2] : memref<128x128xbf16, #tpu.memory_space<vmem>>, vector<128x128xbf16>
    %cst = arith.constant dense<0.000000e+00> : vector<16x128xf32>
    %2 = tpu.matmul %0, %1, %cst {dimension_numbers = #tpu.dot_dimension_numbers<[1], [0], [0], [1], [0, 0, 1, 1], [], []>} : vector<16x128xbf16>, vector<128x128xbf16>, vector<16x128xf32> -> vector<16x128xf32>
    %c0_3 = arith.constant 0 : index
    %c0_4 = arith.constant 0 : index
    %3 = vector.load %arg3[%c0_3, %c0_4] : memref<1x128xf32, #tpu.memory_space<vmem>>, vector<1x128xf32>
    %4 = vector.broadcast %3 : vector<1x128xf32> to vector<16x128xf32>
    %5 = arith.addf %2, %4 : vector<16x128xf32>
    %cst_5 = arith.constant 0.000000e+00 : f32
    %6 = vector.broadcast %cst_5 : f32 to vector<16x128xf32>
    %7 = arith.maximumf %5, %6 : vector<16x128xf32>
    %8 = arith.truncf %7 : vector<16x128xf32> to vector<16x128xbf16>
    %c0_6 = arith.constant 0 : index
    %c0_7 = arith.constant 0 : index
    %9 = vector.load %arg4[%c0_6, %c0_7] : memref<128x256xbf16, #tpu.memory_space<vmem>>, vector<128x256xbf16>
    %cst_8 = arith.constant dense<0.000000e+00> : vector<16x256xf32>
    %10 = tpu.matmul %8, %9, %cst_8 {dimension_numbers = #tpu.dot_dimension_numbers<[1], [0], [0], [1], [0, 0, 1, 1], [], []>} : vector<16x128xbf16>, vector<128x256xbf16>, vector<16x256xf32> -> vector<16x256xf32>
    %c0_9 = arith.constant 0 : index
    %c0_10 = arith.constant 0 : index
    %11 = vector.load %arg5[%c0_9, %c0_10] : memref<1x256xf32, #tpu.memory_space<vmem>>, vector<1x256xf32>
    %12 = vector.broadcast %11 : vector<1x256xf32> to vector<16x256xf32>
    %13 = arith.addf %10, %12 : vector<16x256xf32>
    %cst_11 = arith.constant 0.000000e+00 : f32
    %14 = vector.broadcast %cst_11 : f32 to vector<16x256xf32>
    %15 = arith.maximumf %13, %14 : vector<16x256xf32>
    %16 = arith.truncf %15 : vector<16x256xf32> to vector<16x256xbf16>
    %c0_12 = arith.constant 0 : index
    %c0_13 = arith.constant 0 : index
    %17 = vector.load %arg6[%c0_12, %c0_13] : memref<256x256xbf16, #tpu.memory_space<vmem>>, vector<256x256xbf16>
    %cst_14 = arith.constant dense<0.000000e+00> : vector<16x256xf32>
    %18 = tpu.matmul %16, %17, %cst_14 {dimension_numbers = #tpu.dot_dimension_numbers<[1], [0], [0], [1], [0, 0, 1, 1], [], []>} : vector<16x256xbf16>, vector<256x256xbf16>, vector<16x256xf32> -> vector<16x256xf32>
    %c0_15 = arith.constant 0 : index
    %c0_16 = arith.constant 0 : index
    %19 = vector.load %arg7[%c0_15, %c0_16] : memref<1x256xf32, #tpu.memory_space<vmem>>, vector<1x256xf32>
    %20 = vector.broadcast %19 : vector<1x256xf32> to vector<16x256xf32>
    %21 = arith.addf %18, %20 : vector<16x256xf32>
    %cst_17 = arith.constant 0.000000e+00 : f32
    %22 = vector.broadcast %cst_17 : f32 to vector<16x256xf32>
    %23 = arith.maximumf %21, %22 : vector<16x256xf32>
    %24 = arith.truncf %23 : vector<16x256xf32> to vector<16x256xbf16>
    %cst_18 = arith.constant 0.000000e+00 : f32
    %25 = vector.broadcast %cst_18 : f32 to vector<16x128xf32>
    %c0_19 = arith.constant 0 : index
    %c0_20 = arith.constant 0 : index
    %26 = vector.load %arg8[%c0_19, %c0_20] : memref<256x896xbf16, #tpu.memory_space<vmem>>, vector<256x128xbf16>
    %cst_21 = arith.constant dense<0.000000e+00> : vector<16x128xf32>
    %27 = tpu.matmul %24, %26, %cst_21 {dimension_numbers = #tpu.dot_dimension_numbers<[1], [0], [0], [1], [0, 0, 1, 1], [], []>} : vector<16x256xbf16>, vector<256x128xbf16>, vector<16x128xf32> -> vector<16x128xf32>
    %c0_22 = arith.constant 0 : index
    %c0_23 = arith.constant 0 : index
    %28 = vector.load %arg9[%c0_22, %c0_23] : memref<1x896xf32, #tpu.memory_space<vmem>>, vector<1x128xf32>
    %29 = vector.broadcast %28 : vector<1x128xf32> to vector<16x128xf32>
    %30 = arith.addf %27, %29 : vector<16x128xf32>
    %cst_24 = arith.constant 0.000000e+00 : f32
    %31 = vector.broadcast %cst_24 : f32 to vector<16x128xf32>
    %32 = arith.maximumf %30, %31 : vector<16x128xf32>
    %33 = arith.truncf %32 : vector<16x128xf32> to vector<16x128xbf16>
    %c0_25 = arith.constant 0 : index
    %c0_26 = arith.constant 0 : index
    %34 = vector.load %arg10[%c0_25, %c0_26] : memref<896x128xbf16, #tpu.memory_space<vmem>>, vector<128x128xbf16>
    %cst_27 = arith.constant dense<0.000000e+00> : vector<16x128xf32>
    %35 = tpu.matmul %33, %34, %cst_27 {dimension_numbers = #tpu.dot_dimension_numbers<[1], [0], [0], [1], [0, 0, 1, 1], [], []>} : vector<16x128xbf16>, vector<128x128xbf16>, vector<16x128xf32> -> vector<16x128xf32>
    %36 = arith.addf %25, %35 : vector<16x128xf32>
    %c0_28 = arith.constant 0 : index
    %c128 = arith.constant 128 : index
    %37 = vector.load %arg8[%c0_28, %c128] : memref<256x896xbf16, #tpu.memory_space<vmem>>, vector<256x128xbf16>
    %cst_29 = arith.constant dense<0.000000e+00> : vector<16x128xf32>
    %38 = tpu.matmul %24, %37, %cst_29 {dimension_numbers = #tpu.dot_dimension_numbers<[1], [0], [0], [1], [0, 0, 1, 1], [], []>} : vector<16x256xbf16>, vector<256x128xbf16>, vector<16x128xf32> -> vector<16x128xf32>
    %c0_30 = arith.constant 0 : index
    %c128_31 = arith.constant 128 : index
    %39 = vector.load %arg9[%c0_30, %c128_31] : memref<1x896xf32, #tpu.memory_space<vmem>>, vector<1x128xf32>
    %40 = vector.broadcast %39 : vector<1x128xf32> to vector<16x128xf32>
    %41 = arith.addf %38, %40 : vector<16x128xf32>
    %cst_32 = arith.constant 0.000000e+00 : f32
    %42 = vector.broadcast %cst_32 : f32 to vector<16x128xf32>
    %43 = arith.maximumf %41, %42 : vector<16x128xf32>
    %44 = arith.truncf %43 : vector<16x128xf32> to vector<16x128xbf16>
    %c128_33 = arith.constant 128 : index
    %c0_34 = arith.constant 0 : index
    %45 = vector.load %arg10[%c128_33, %c0_34] : memref<896x128xbf16, #tpu.memory_space<vmem>>, vector<128x128xbf16>
    %cst_35 = arith.constant dense<0.000000e+00> : vector<16x128xf32>
    %46 = tpu.matmul %44, %45, %cst_35 {dimension_numbers = #tpu.dot_dimension_numbers<[1], [0], [0], [1], [0, 0, 1, 1], [], []>} : vector<16x128xbf16>, vector<128x128xbf16>, vector<16x128xf32> -> vector<16x128xf32>
    %47 = arith.addf %36, %46 : vector<16x128xf32>
    %c0_36 = arith.constant 0 : index
    %c256 = arith.constant 256 : index
    %48 = vector.load %arg8[%c0_36, %c256] : memref<256x896xbf16, #tpu.memory_space<vmem>>, vector<256x128xbf16>
    %cst_37 = arith.constant dense<0.000000e+00> : vector<16x128xf32>
    %49 = tpu.matmul %24, %48, %cst_37 {dimension_numbers = #tpu.dot_dimension_numbers<[1], [0], [0], [1], [0, 0, 1, 1], [], []>} : vector<16x256xbf16>, vector<256x128xbf16>, vector<16x128xf32> -> vector<16x128xf32>
    %c0_38 = arith.constant 0 : index
    %c256_39 = arith.constant 256 : index
    %50 = vector.load %arg9[%c0_38, %c256_39] : memref<1x896xf32, #tpu.memory_space<vmem>>, vector<1x128xf32>
    %51 = vector.broadcast %50 : vector<1x128xf32> to vector<16x128xf32>
    %52 = arith.addf %49, %51 : vector<16x128xf32>
    %cst_40 = arith.constant 0.000000e+00 : f32
    %53 = vector.broadcast %cst_40 : f32 to vector<16x128xf32>
    %54 = arith.maximumf %52, %53 : vector<16x128xf32>
    %55 = arith.truncf %54 : vector<16x128xf32> to vector<16x128xbf16>
    %c256_41 = arith.constant 256 : index
    %c0_42 = arith.constant 0 : index
    %56 = vector.load %arg10[%c256_41, %c0_42] : memref<896x128xbf16, #tpu.memory_space<vmem>>, vector<128x128xbf16>
    %cst_43 = arith.constant dense<0.000000e+00> : vector<16x128xf32>
    %57 = tpu.matmul %55, %56, %cst_43 {dimension_numbers = #tpu.dot_dimension_numbers<[1], [0], [0], [1], [0, 0, 1, 1], [], []>} : vector<16x128xbf16>, vector<128x128xbf16>, vector<16x128xf32> -> vector<16x128xf32>
    %58 = arith.addf %47, %57 : vector<16x128xf32>
    %c0_44 = arith.constant 0 : index
    %c384 = arith.constant 384 : index
    %59 = vector.load %arg8[%c0_44, %c384] : memref<256x896xbf16, #tpu.memory_space<vmem>>, vector<256x128xbf16>
    %cst_45 = arith.constant dense<0.000000e+00> : vector<16x128xf32>
    %60 = tpu.matmul %24, %59, %cst_45 {dimension_numbers = #tpu.dot_dimension_numbers<[1], [0], [0], [1], [0, 0, 1, 1], [], []>} : vector<16x256xbf16>, vector<256x128xbf16>, vector<16x128xf32> -> vector<16x128xf32>
    %c0_46 = arith.constant 0 : index
    %c384_47 = arith.constant 384 : index
    %61 = vector.load %arg9[%c0_46, %c384_47] : memref<1x896xf32, #tpu.memory_space<vmem>>, vector<1x128xf32>
    %62 = vector.broadcast %61 : vector<1x128xf32> to vector<16x128xf32>
    %63 = arith.addf %60, %62 : vector<16x128xf32>
    %cst_48 = arith.constant 0.000000e+00 : f32
    %64 = vector.broadcast %cst_48 : f32 to vector<16x128xf32>
    %65 = arith.maximumf %63, %64 : vector<16x128xf32>
    %66 = arith.truncf %65 : vector<16x128xf32> to vector<16x128xbf16>
    %c384_49 = arith.constant 384 : index
    %c0_50 = arith.constant 0 : index
    %67 = vector.load %arg10[%c384_49, %c0_50] : memref<896x128xbf16, #tpu.memory_space<vmem>>, vector<128x128xbf16>
    %cst_51 = arith.constant dense<0.000000e+00> : vector<16x128xf32>
    %68 = tpu.matmul %66, %67, %cst_51 {dimension_numbers = #tpu.dot_dimension_numbers<[1], [0], [0], [1], [0, 0, 1, 1], [], []>} : vector<16x128xbf16>, vector<128x128xbf16>, vector<16x128xf32> -> vector<16x128xf32>
    %69 = arith.addf %58, %68 : vector<16x128xf32>
    %c0_52 = arith.constant 0 : index
    %c512 = arith.constant 512 : index
    %70 = vector.load %arg8[%c0_52, %c512] : memref<256x896xbf16, #tpu.memory_space<vmem>>, vector<256x128xbf16>
    %cst_53 = arith.constant dense<0.000000e+00> : vector<16x128xf32>
    %71 = tpu.matmul %24, %70, %cst_53 {dimension_numbers = #tpu.dot_dimension_numbers<[1], [0], [0], [1], [0, 0, 1, 1], [], []>} : vector<16x256xbf16>, vector<256x128xbf16>, vector<16x128xf32> -> vector<16x128xf32>
    %c0_54 = arith.constant 0 : index
    %c512_55 = arith.constant 512 : index
    %72 = vector.load %arg9[%c0_54, %c512_55] : memref<1x896xf32, #tpu.memory_space<vmem>>, vector<1x128xf32>
    %73 = vector.broadcast %72 : vector<1x128xf32> to vector<16x128xf32>
    %74 = arith.addf %71, %73 : vector<16x128xf32>
    %cst_56 = arith.constant 0.000000e+00 : f32
    %75 = vector.broadcast %cst_56 : f32 to vector<16x128xf32>
    %76 = arith.maximumf %74, %75 : vector<16x128xf32>
    %77 = arith.truncf %76 : vector<16x128xf32> to vector<16x128xbf16>
    %c512_57 = arith.constant 512 : index
    %c0_58 = arith.constant 0 : index
    %78 = vector.load %arg10[%c512_57, %c0_58] : memref<896x128xbf16, #tpu.memory_space<vmem>>, vector<128x128xbf16>
    %cst_59 = arith.constant dense<0.000000e+00> : vector<16x128xf32>
    %79 = tpu.matmul %77, %78, %cst_59 {dimension_numbers = #tpu.dot_dimension_numbers<[1], [0], [0], [1], [0, 0, 1, 1], [], []>} : vector<16x128xbf16>, vector<128x128xbf16>, vector<16x128xf32> -> vector<16x128xf32>
    %80 = arith.addf %69, %79 : vector<16x128xf32>
    %c0_60 = arith.constant 0 : index
    %c640 = arith.constant 640 : index
    %81 = vector.load %arg8[%c0_60, %c640] : memref<256x896xbf16, #tpu.memory_space<vmem>>, vector<256x128xbf16>
    %cst_61 = arith.constant dense<0.000000e+00> : vector<16x128xf32>
    %82 = tpu.matmul %24, %81, %cst_61 {dimension_numbers = #tpu.dot_dimension_numbers<[1], [0], [0], [1], [0, 0, 1, 1], [], []>} : vector<16x256xbf16>, vector<256x128xbf16>, vector<16x128xf32> -> vector<16x128xf32>
    %c0_62 = arith.constant 0 : index
    %c640_63 = arith.constant 640 : index
    %83 = vector.load %arg9[%c0_62, %c640_63] : memref<1x896xf32, #tpu.memory_space<vmem>>, vector<1x128xf32>
    %84 = vector.broadcast %83 : vector<1x128xf32> to vector<16x128xf32>
    %85 = arith.addf %82, %84 : vector<16x128xf32>
    %cst_64 = arith.constant 0.000000e+00 : f32
    %86 = vector.broadcast %cst_64 : f32 to vector<16x128xf32>
    %87 = arith.maximumf %85, %86 : vector<16x128xf32>
    %88 = arith.truncf %87 : vector<16x128xf32> to vector<16x128xbf16>
    %c640_65 = arith.constant 640 : index
    %c0_66 = arith.constant 0 : index
    %89 = vector.load %arg10[%c640_65, %c0_66] : memref<896x128xbf16, #tpu.memory_space<vmem>>, vector<128x128xbf16>
    %cst_67 = arith.constant dense<0.000000e+00> : vector<16x128xf32>
    %90 = tpu.matmul %88, %89, %cst_67 {dimension_numbers = #tpu.dot_dimension_numbers<[1], [0], [0], [1], [0, 0, 1, 1], [], []>} : vector<16x128xbf16>, vector<128x128xbf16>, vector<16x128xf32> -> vector<16x128xf32>
    %91 = arith.addf %80, %90 : vector<16x128xf32>
    %c0_68 = arith.constant 0 : index
    %c768 = arith.constant 768 : index
    %92 = vector.load %arg8[%c0_68, %c768] : memref<256x896xbf16, #tpu.memory_space<vmem>>, vector<256x128xbf16>
    %cst_69 = arith.constant dense<0.000000e+00> : vector<16x128xf32>
    %93 = tpu.matmul %24, %92, %cst_69 {dimension_numbers = #tpu.dot_dimension_numbers<[1], [0], [0], [1], [0, 0, 1, 1], [], []>} : vector<16x256xbf16>, vector<256x128xbf16>, vector<16x128xf32> -> vector<16x128xf32>
    %c0_70 = arith.constant 0 : index
    %c768_71 = arith.constant 768 : index
    %94 = vector.load %arg9[%c0_70, %c768_71] : memref<1x896xf32, #tpu.memory_space<vmem>>, vector<1x128xf32>
    %95 = vector.broadcast %94 : vector<1x128xf32> to vector<16x128xf32>
    %96 = arith.addf %93, %95 : vector<16x128xf32>
    %cst_72 = arith.constant 0.000000e+00 : f32
    %97 = vector.broadcast %cst_72 : f32 to vector<16x128xf32>
    %98 = arith.maximumf %96, %97 : vector<16x128xf32>
    %99 = arith.truncf %98 : vector<16x128xf32> to vector<16x128xbf16>
    %c768_73 = arith.constant 768 : index
    %c0_74 = arith.constant 0 : index
    %100 = vector.load %arg10[%c768_73, %c0_74] : memref<896x128xbf16, #tpu.memory_space<vmem>>, vector<128x128xbf16>
    %cst_75 = arith.constant dense<0.000000e+00> : vector<16x128xf32>
    %101 = tpu.matmul %99, %100, %cst_75 {dimension_numbers = #tpu.dot_dimension_numbers<[1], [0], [0], [1], [0, 0, 1, 1], [], []>} : vector<16x128xbf16>, vector<128x128xbf16>, vector<16x128xf32> -> vector<16x128xf32>
    %102 = arith.addf %91, %101 : vector<16x128xf32>
    %c0_76 = arith.constant 0 : index
    %c0_77 = arith.constant 0 : index
    %103 = vector.load %arg11[%c0_76, %c0_77] : memref<1x128xf32, #tpu.memory_space<vmem>>, vector<1x128xf32>
    %104 = vector.broadcast %103 : vector<1x128xf32> to vector<16x128xf32>
    %105 = arith.addf %102, %104 : vector<16x128xf32>
    %cst_78 = arith.constant 0.000000e+00 : f32
    %106 = vector.broadcast %cst_78 : f32 to vector<16x128xf32>
    %107 = arith.subf %106, %105 : vector<16x128xf32>
    %108 = math.exp %107 : vector<16x128xf32>
    %cst_79 = arith.constant 1.000000e+00 : f32
    %109 = vector.broadcast %cst_79 : f32 to vector<16x128xf32>
    %110 = arith.addf %109, %108 : vector<16x128xf32>
    %111 = tpu.reciprocal %110 {approx = true} : vector<16x128xf32> -> vector<16x128xf32>
    %c0_80 = arith.constant 0 : index
    %c0_81 = arith.constant 0 : index
    %112 = vector.load %arg12[%c0_80, %c0_81] : memref<16x128xf32, #tpu.memory_space<vmem>>, vector<16x128xf32>
    tpu.vector_store %arg12[%c0_80, %c0_81], %111 {strides = array<i32>} : memref<16x128xf32, #tpu.memory_space<vmem>>, vector<16x128xf32>,
    return
  }
  func.func @transform_0(%arg0: i32) -> (i32, i32) {
    %c0_i32 = arith.constant 0 : i32
    %c0_i32_0 = arith.constant 0 : i32
    return %arg0, %c0_i32 : i32, i32
  }
  func.func @transform_1(%arg0: i32) -> (i32, i32) {
    %c0_i32 = arith.constant 0 : i32
    %c0_i32_0 = arith.constant 0 : i32
    %c0_i32_1 = arith.constant 0 : i32
    return %c0_i32, %c0_i32_0 : i32, i32
  }
  func.func @transform_2(%arg0: i32) -> (i32, i32) {
    %c0_i32 = arith.constant 0 : i32
    %c0_i32_0 = arith.constant 0 : i32
    %c0_i32_1 = arith.constant 0 : i32
    return %c0_i32, %c0_i32_0 : i32, i32
  }
  func.func @transform_3(%arg0: i32) -> (i32, i32) {
    %c0_i32 = arith.constant 0 : i32
    %c0_i32_0 = arith.constant 0 : i32
    %c0_i32_1 = arith.constant 0 : i32
    return %c0_i32, %c0_i32_0 : i32, i32
  }
  func.func @transform_4(%arg0: i32) -> (i32, i32) {
    %c0_i32 = arith.constant 0 : i32
    %c0_i32_0 = arith.constant 0 : i32
    %c0_i32_1 = arith.constant 0 : i32
    return %c0_i32, %c0_i32_0 : i32, i32
  }
  func.func @transform_5(%arg0: i32) -> (i32, i32) {
    %c0_i32 = arith.constant 0 : i32
    %c0_i32_0 = arith.constant 0 : i32
    %c0_i32_1 = arith.constant 0 : i32
    return %c0_i32, %c0_i32_0 : i32, i32
  }
  func.func @transform_6(%arg0: i32) -> (i32, i32) {
    %c0_i32 = arith.constant 0 : i32
    %c0_i32_0 = arith.constant 0 : i32
    %c0_i32_1 = arith.constant 0 : i32
    return %c0_i32, %c0_i32_0 : i32, i32
  }
  func.func @transform_7(%arg0: i32) -> (i32, i32) {
    %c0_i32 = arith.constant 0 : i32
    %c0_i32_0 = arith.constant 0 : i32
    %c0_i32_1 = arith.constant 0 : i32
    return %c0_i32, %c0_i32_0 : i32, i32
  }
  func.func @transform_8(%arg0: i32) -> (i32, i32) {
    %c0_i32 = arith.constant 0 : i32
    %c0_i32_0 = arith.constant 0 : i32
    %c0_i32_1 = arith.constant 0 : i32
    return %c0_i32, %c0_i32_0 : i32, i32
  }
  func.func @transform_9(%arg0: i32) -> (i32, i32) {
    %c0_i32 = arith.constant 0 : i32
    %c0_i32_0 = arith.constant 0 : i32
    %c0_i32_1 = arith.constant 0 : i32
    return %c0_i32, %c0_i32_0 : i32, i32
  }
  func.func @transform_10(%arg0: i32) -> (i32, i32) {
    %c0_i32 = arith.constant 0 : i32
    %c0_i32_0 = arith.constant 0 : i32
    %c0_i32_1 = arith.constant 0 : i32
    return %c0_i32, %c0_i32_0 : i32, i32
  }
  func.func @transform_11(%arg0: i32) -> (i32, i32) {
    %c0_i32 = arith.constant 0 : i32
    %c0_i32_0 = arith.constant 0 : i32
    return %arg0, %c0_i32 : i32, i32
  }
}

</mosaic_0001>

<llo_original>
// kernel: tpu_custom_call.1
$region0: #{tpu_custom_call.1}
  #allocation0 [shape = 'u32[]', space=smem, size = 0x4, offset = 0x4, fixed_abs, tag = 'smem constant byte address 0x4 - core index']
  #allocation1 [shape = 'u32[144,128]{1,0:T(1,128)}', space=vmem, size = 0x12000, scoped, tag = 'internal scratch']
  %s0 = inlined_call_operand.hbm [shape: f32[8,128], index: 0, kind: input, shape index: {}]
  %s1 = inlined_call_operand.hbm [shape: f32[16,128], index: 1, kind: output, shape index: {}]
  %s2 = sld [smem:[#allocation0]]
  $region41: #{tpu_custom_call.1} parent=0
    _
  %s4 = ssub.s32 1, %s2
  %s5 = scalar_select 0, %s4, %s2
  $region1: #{tpu_custom_call.1} parent=0
    #allocation2 [shape = 'u8[4096]{0}', space=vmem, size = 0x1000, scoped, tag = 'input window, operand 0, single buffered']
    #allocation3 [shape = 's32[2]{0}', space=sflag, size = 0x8, scoped, tag = 'scoped memory for tpu_custom_call.1']
    #allocation4 [shape = 's32[2]{0}', space=sflag, size = 0x8, scoped, tag = 'scoped memory for tpu_custom_call.1']
    #allocation5 [shape = 'u8[8192]{0}', space=vmem, size = 0x2000, scoped, tag = 'output window, operand 0']
    %6 = vsyncpa [#allocation3], 0
    %7 = vsyncpa [#allocation4], 0
    %s8 = scalar_lea.sflag [#allocation4], 1
    %9 = vsyncpa %s8, 0
    loop: start=0, step=1, limit=4
    $region2: #{tpu_custom_call.1} parent=1 // loop_pre_header
      _
    $region3: #{tpu_custom_call.1} parent=1 // loop_header
      %s11 = sphi 0, %s15
      %p12 = scmp.ge.s32.totalorder %s11, 4
      %s19 = sphi 0, %s19
      %s21 = sphi 0, %s19
      %s22 = sphi 0, %s21
      %s36 = sphi 0, %s22
      %s42 = sphi 0, %s44
      %s45 = sphi 0, %s42
      %s46 = sphi 0, %s45
      %s62 = sphi 0, %s46
    $region4: #{tpu_custom_call.1} parent=1 // loop_header_branch
      %14 = sbr.rel (%p12) target = $region8
    $region5: #{tpu_custom_call.1} parent=1 // loop_body
      %s16 = ssub.s32 %s11, 1
      %s17 = ssub.s32 %s11, 2
      %s18 = sadd.s32 %s11, 1
      %s20 = sadd.s32 %s19, 1
      %p23 = scmp.eq.s32.totalorder %s11, 1
      %p24 = scmp.ne.s32.totalorder %s19, %s21
      %p25 = scmp.eq.s32.totalorder %s11, 0
      %p26 = por %p24, %p25
      %p27 = scmp.ne.s32.totalorder %s19, %s21
      %p28 = scmp.eq.s32.totalorder %s16, 1
      %p29 = por %p27, %p28
      %p30 = scmp.ne.s32.totalorder %s21, %s22
      %p31 = scmp.eq.s32.totalorder %s16, 0
      %p32 = por %p30, %p31
      %p33 = scmp.ne.s32.totalorder %s21, %s22
      %p34 = scmp.eq.s32.totalorder %s17, 1
      %p35 = por %p33, %p34
      %p37 = scmp.ne.s32.totalorder %s22, %s36
      %p38 = scmp.eq.s32.totalorder %s17, 0
      %p39 = por %p37, %p38
      %s40 = ssub.s32 %s11, %s18
      %p41 = scmp.eq.s32.totalorder %s40, 0
      %s43 = sadd.s32 %s42, 1
      %s44 = scalar_select %p41, %s42, %s43
      %p47 = pneg %p41
      %p48 = scmp.eq.s32.totalorder %s11, 1
      %p49 = por %p47, %p48
      %p50 = scmp.ne.s32.totalorder %s42, %s45
      %p51 = scmp.eq.s32.totalorder %s11, 0
      %p52 = por %p50, %p51
      %p53 = scmp.ne.s32.totalorder %s42, %s45
      %p54 = scmp.eq.s32.totalorder %s16, 1
      %p55 = por %p53, %p54
      %p56 = scmp.ne.s32.totalorder %s45, %s46
      %p57 = scmp.eq.s32.totalorder %s16, 0
      %p58 = por %p56, %p57
      %p59 = scmp.ne.s32.totalorder %s45, %s46
      %p60 = scmp.eq.s32.totalorder %s17, 1
      %p61 = por %p59, %p60
      %p63 = scmp.ne.s32.totalorder %s46, %s62
      %p64 = scmp.eq.s32.totalorder %s17, 0
      %p65 = por %p63, %p64
      %p66 = scmp.le.s32.totalorder 1, %s11
      %p67 = scmp.lt.s32.totalorder %s11, 3
      %p68 = pnand %p66, %p67
      %p69 = pneg %p68
      // Predicated region
      $region9: #{tpu_custom_call.1} parent=5 // pred_check
        _
      $region10: #{tpu_custom_call.1} parent=5 // pred_check_branch
        %71 = sbr.rel (%p68) target = $region12
      $region11: #{tpu_custom_call.1} parent=5 // pred_region
        %s72 = ssub.s32 %s11, 1
        // Predicated region
        $region13: #{tpu_custom_call.1} parent=11 // pred_check
          %p73 = pneg %p32
        $region14: #{tpu_custom_call.1} parent=11 // pred_check_branch
          %75 = sbr.rel (%p73) target = $region16
        $region15: #{tpu_custom_call.1} parent=11 // pred_region
          %s77 = ssub.s32 128, 128
          %78 = vsyncadd [#allocation3], %s77
          %s80 = sshll.u32 [#allocation2], 4
          %s81 = int_to_ptr.vmem [resolvable:$true] %s80
          %83 = dma.hbm_to_vmem [thread:$0]  %s0, 128, %s81, [#allocation3]
        $region16: #{tpu_custom_call.1} parent=11 // pred_fallthru
          _
      $region12: #{tpu_custom_call.1} parent=5 // pred_fallthru
        _
      %p84 = scmp.lt.s32.totalorder %s11, 2
      // Predicated region
      $region17: #{tpu_custom_call.1} parent=5 // pred_check
        %p85 = pneg %p84
      $region18: #{tpu_custom_call.1} parent=5 // pred_check_branch
        %87 = sbr.rel (%p85) target = $region20
      $region19: #{tpu_custom_call.1} parent=5 // pred_region
        _
      $region20: #{tpu_custom_call.1} parent=5 // pred_fallthru
        _
      %p88 = scmp.le.s32.totalorder 1, %s11
      %p89 = scmp.lt.s32.totalorder %s11, 3
      %p90 = pnand %p88, %p89
      %p91 = pneg %p90
      // Predicated region
      $region21: #{tpu_custom_call.1} parent=5 // pred_check
        _
      $region22: #{tpu_custom_call.1} parent=5 // pred_check_branch
        %93 = sbr.rel (%p90) target = $region24
      $region23: #{tpu_custom_call.1} parent=5 // pred_region
        %s94 = ssub.s32 %s11, 1
        // Predicated region
        $region25: #{tpu_custom_call.1} parent=23 // pred_check
          %p95 = pneg %p32
        $region26: #{tpu_custom_call.1} parent=23 // pred_check_branch
          %97 = sbr.rel (%p95) target = $region28
        $region27: #{tpu_custom_call.1} parent=23 // pred_region
          %98 = dma.done [#allocation3], 128
        $region28: #{tpu_custom_call.1} parent=23 // pred_fallthru
          _
        %p99 = pneg %p32
        %p100 = pneg %p29
        %p101 = pneg %p58
        %p102 = pneg %p55
        %s103 = sand.u32 %s45, 1
        %s104 = scalar_lea.sflag [#allocation4], %s103
        %s105 = sand.u32 %s45, 1
        %s106 = smul.addr %s105, 8
        %s107 = scalar_lea.vmem [#allocation5], %s106
        %v108 = vld [vmem:[#allocation2] sm:$0xff]
        %v109 = vmul.f32 %v108, 2.0
        %110 = vst [vmem:[%s107] sm:$0xff] %v109
        %s111 = sand.u32 %s45, 1
        %s112 = scalar_lea.sflag [#allocation4], %s111
        %s113 = sand.u32 %s45, 1
        %s114 = smul.addr %s113, 8
        %s115 = scalar_lea.vmem [#allocation5], %s114
        // Predicated region
        $region29: #{tpu_custom_call.1} parent=23 // pred_check
          %p116 = pneg %p55
        $region30: #{tpu_custom_call.1} parent=23 // pred_check_branch
          %118 = sbr.rel (%p116) target = $region32
        $region31: #{tpu_custom_call.1} parent=23 // pred_region
          %s120 = ssub.s32 128, 128
          %121 = vsyncadd %s112, %s120
          %s122 = smul.addr %s16, 128
          %s123 = scalar_lea.hbm %s1, %s122
          %s125 = sshll.u32 %s115, 4
          %s126 = int_to_ptr.vmem [resolvable:$true] %s125
          %128 = dma.vmem_to_hbm [thread:$0]  %s126, 128, %s123, %s112
        $region32: #{tpu_custom_call.1} parent=23 // pred_fallthru
          _
      $region24: #{tpu_custom_call.1} parent=5 // pred_fallthru
        _
      %p129 = scmp.le.s32.totalorder 2, %s11
      // Predicated region
      $region33: #{tpu_custom_call.1} parent=5 // pred_check
        %p130 = pneg %p129
      $region34: #{tpu_custom_call.1} parent=5 // pred_check_branch
        %132 = sbr.rel (%p130) target = $region36
      $region35: #{tpu_custom_call.1} parent=5 // pred_region
        %s133 = ssub.s32 %s11, 2
        // Predicated region
        $region37: #{tpu_custom_call.1} parent=35 // pred_check
          %p134 = pneg %p61
        $region38: #{tpu_custom_call.1} parent=35 // pred_check_branch
          %136 = sbr.rel (%p134) target = $region40
        $region39: #{tpu_custom_call.1} parent=35 // pred_region
          %s137 = sand.u32 %s46, 1
          %s138 = scalar_lea.sflag [#allocation4], %s137
          %s139 = sand.u32 %s46, 1
          %s140 = smul.addr %s139, 8
          %s141 = scalar_lea.vmem [#allocation5], %s140
          %142 = dma.done %s138, 128
        $region40: #{tpu_custom_call.1} parent=35 // pred_fallthru
          _
      $region36: #{tpu_custom_call.1} parent=5 // pred_fallthru
        _
    $region6: #{tpu_custom_call.1} parent=1 // loop_footer
      %s15 = sadd.s32 1, %s11
    $region7: #{tpu_custom_call.1} parent=1 // loop_footer_branch
      %10 = sbr.rel target = $region3
    $region8: #{tpu_custom_call.1} parent=1 // loop_exit
      _
    %143 = vsyncpa [#allocation3], 1
    %s144 = scalar_lea.sflag [#allocation3], 1
    %145 = vsyncpa %s144, 1
    %146 = vsyncpa [#allocation4], 1
    %s147 = scalar_lea.sflag [#allocation4], 1
    %148 = vsyncpa %s147, 1

// kernel: _gmmn_forward_impl.1
$region0: #{_gmmn_forward_impl.1}
  #allocation0 [shape = 'u32[]', space=smem, size = 0x4, offset = 0x4, fixed_abs, tag = 'smem constant byte address 0x4 - core index']
  #allocation1 [shape = 'u32[144,128]{1,0:T(1,128)}', space=vmem, size = 0x12000, scoped, tag = 'internal scratch']
  %s0 = inlined_call_operand.vmem [shape: bf16[16,128], index: 0, kind: input, shape index: {}]
  %s1 = inlined_call_operand.vmem [shape: bf16[128,128], index: 1, kind: input, shape index: {}]
  %s2 = inlined_call_operand.vmem [shape: f32[1,128], index: 2, kind: input, shape index: {}]
  %s3 = inlined_call_operand.vmem [shape: bf16[128,256], index: 3, kind: input, shape index: {}]
  %s4 = inlined_call_operand.vmem [shape: f32[1,256], index: 4, kind: input, shape index: {}]
  %s5 = inlined_call_operand.vmem [shape: bf16[256,256], index: 5, kind: input, shape index: {}]
  %s6 = inlined_call_operand.vmem [shape: f32[1,256], index: 6, kind: input, shape index: {}]
  %s7 = inlined_call_operand.vmem [shape: bf16[256,896], index: 7, kind: input, shape index: {}]
  %s8 = inlined_call_operand.vmem [shape: f32[1,896], index: 8, kind: input, shape index: {}]
  %s9 = inlined_call_operand.vmem [shape: bf16[896,128], index: 9, kind: input, shape index: {}]
  %s10 = inlined_call_operand.vmem [shape: f32[1,128], index: 10, kind: input, shape index: {}]
  %s11 = inlined_call_operand.hbm [shape: f32[16,128], index: 11, kind: output, shape index: {}]
  %s12 = sld [smem:[#allocation0]]
  $region54: #{_gmmn_forward_impl.1} parent=0
    _
  %s14 = ssub.s32 1, %s12
  %s15 = scalar_select 0, %s14, %s12
  $region1: #{_gmmn_forward_impl.1} parent=0
    #allocation2 [shape = 'u8[8192]{0}', space=vmem, size = 0x2000, scoped, tag = 'output window, operand 0, single buffered']
    #allocation3 [shape = 's32[1]{0}', space=sflag, size = 0x4, scoped, tag = 'scoped memory for _gmmn_forward_impl.1']
    %16 = vsyncpa [#allocation3], 0
    // Predicated region
    $region2: #{_gmmn_forward_impl.1} parent=1 // pred_check
      _
    $region3: #{_gmmn_forward_impl.1} parent=1 // pred_check_branch
      %18 = sbr.rel (0) target = $region5
    $region4: #{_gmmn_forward_impl.1} parent=1 // pred_region
      _
    $region5: #{_gmmn_forward_impl.1} parent=1 // pred_fallthru
      _
    // Predicated region
    $region6: #{_gmmn_forward_impl.1} parent=1 // pred_check
      _
    $region7: #{_gmmn_forward_impl.1} parent=1 // pred_check_branch
      %20 = sbr.rel (0) target = $region9
    $region8: #{_gmmn_forward_impl.1} parent=1 // pred_region
      _
    $region9: #{_gmmn_forward_impl.1} parent=1 // pred_fallthru
      _
    // Predicated region
    $region10: #{_gmmn_forward_impl.1} parent=1 // pred_check
      _
    $region11: #{_gmmn_forward_impl.1} parent=1 // pred_check_branch
      %22 = sbr.rel (0) target = $region13
    $region12: #{_gmmn_forward_impl.1} parent=1 // pred_region
      _
    $region13: #{_gmmn_forward_impl.1} parent=1 // pred_fallthru
      _
    // Predicated region
    $region14: #{_gmmn_forward_impl.1} parent=1 // pred_check
      _
    $region15: #{_gmmn_forward_impl.1} parent=1 // pred_check_branch
      %24 = sbr.rel (0) target = $region17
    $region16: #{_gmmn_forward_impl.1} parent=1 // pred_region
      _
    $region17: #{_gmmn_forward_impl.1} parent=1 // pred_fallthru
      _
    // Predicated region
    $region18: #{_gmmn_forward_impl.1} parent=1 // pred_check
      _
    $region19: #{_gmmn_forward_impl.1} parent=1 // pred_check_branch
      %26 = sbr.rel (0) target = $region21
    $region20: #{_gmmn_forward_impl.1} parent=1 // pred_region
      _
    $region21: #{_gmmn_forward_impl.1} parent=1 // pred_fallthru
      _
    // Predicated region
    $region22: #{_gmmn_forward_impl.1} parent=1 // pred_check
      _
    $region23: #{_gmmn_forward_impl.1} parent=1 // pred_check_branch
      %28 = sbr.rel (0) target = $region25
    $region24: #{_gmmn_forward_impl.1} parent=1 // pred_region
      _
    $region25: #{_gmmn_forward_impl.1} parent=1 // pred_fallthru
      _
    // Predicated region
    $region26: #{_gmmn_forward_impl.1} parent=1 // pred_check
      _
    $region27: #{_gmmn_forward_impl.1} parent=1 // pred_check_branch
      %30 = sbr.rel (0) target = $region29
    $region28: #{_gmmn_forward_impl.1} parent=1 // pred_region
      _
    $region29: #{_gmmn_forward_impl.1} parent=1 // pred_fallthru
      _
    // Predicated region
    $region30: #{_gmmn_forward_impl.1} parent=1 // pred_check
      _
    $region31: #{_gmmn_forward_impl.1} parent=1 // pred_check_branch
      %32 = sbr.rel (0) target = $region33
    $region32: #{_gmmn_forward_impl.1} parent=1 // pred_region
      _
    $region33: #{_gmmn_forward_impl.1} parent=1 // pred_fallthru
      _
    // Predicated region
    $region34: #{_gmmn_forward_impl.1} parent=1 // pred_check
      _
    $region35: #{_gmmn_forward_impl.1} parent=1 // pred_check_branch
      %34 = sbr.rel (0) target = $region37
    $region36: #{_gmmn_forward_impl.1} parent=1 // pred_region
      _
    $region37: #{_gmmn_forward_impl.1} parent=1 // pred_fallthru
      _
    // Predicated region
    $region38: #{_gmmn_forward_impl.1} parent=1 // pred_check
      _
    $region39: #{_gmmn_forward_impl.1} parent=1 // pred_check_branch
      %36 = sbr.rel (0) target = $region41
    $region40: #{_gmmn_forward_impl.1} parent=1 // pred_region
      _
    $region41: #{_gmmn_forward_impl.1} parent=1 // pred_fallthru
      _
    // Predicated region
    $region42: #{_gmmn_forward_impl.1} parent=1 // pred_check
      _
    $region43: #{_gmmn_forward_impl.1} parent=1 // pred_check_branch
      %38 = sbr.rel (0) target = $region45
    $region44: #{_gmmn_forward_impl.1} parent=1 // pred_region
      _
    $region45: #{_gmmn_forward_impl.1} parent=1 // pred_fallthru
      _
    %v40 = vld [vmem:[%s0] sm:$0xf]
    %v41 = vld [vmem:[%s0 + $0x4] sm:$0xf]
    %v42 = vld [vmem:[%s1] sm:$0xf]
    %v43 = vld [vmem:[%s1 + $0x4] sm:$0xf]
    %v44 = vld [vmem:[%s1 + $0x8] sm:$0xf]
    %v45 = vld [vmem:[%s1 + $0xc] sm:$0xf]
    %v46 = vld [vmem:[%s1 + $0x10] sm:$0xf]
    %v47 = vld [vmem:[%s1 + $0x14] sm:$0xf]
    %v48 = vld [vmem:[%s1 + $0x18] sm:$0xf]
    %v49 = vld [vmem:[%s1 + $0x1c] sm:$0xf]
    %v50 = vld [vmem:[%s1 + $0x20] sm:$0xf]
    %v51 = vld [vmem:[%s1 + $0x24] sm:$0xf]
    %v52 = vld [vmem:[%s1 + $0x28] sm:$0xf]
    %v53 = vld [vmem:[%s1 + $0x2c] sm:$0xf]
    %v54 = vld [vmem:[%s1 + $0x30] sm:$0xf]
    %v55 = vld [vmem:[%s1 + $0x34] sm:$0xf]
    %v56 = vld [vmem:[%s1 + $0x38] sm:$0xf]
    %v57 = vld [vmem:[%s1 + $0x3c] sm:$0xf]
    %v58 = vld [vmem:[%s2] sm:$0x1]
    %v60 = vlaneseq
    %v61 = vshrl.u32 %v60, 7
    %v62 = vsub.s32 0, %v61
    %v63 = vrot.slane %v58, %v62
    %v67 = vunpack.c.l.b16 %v40
    %v68 = vunpack.c.l.b16 %v41
    %v69 = vpack.c.b16 %v68, %v67
    %v87 = vunpack.c.l.b16 %v42
    %v88 = vunpack.c.l.b16 %v43
    %v89 = vunpack.c.l.b16 %v44
    %v90 = vunpack.c.l.b16 %v45
    %v91 = vunpack.c.l.b16 %v46
    %v92 = vunpack.c.l.b16 %v47
    %v93 = vunpack.c.l.b16 %v48
    %v94 = vunpack.c.l.b16 %v49
    %v95 = vunpack.c.l.b16 %v50
    %v96 = vunpack.c.l.b16 %v51
    %v97 = vunpack.c.l.b16 %v52
    %v98 = vunpack.c.l.b16 %v53
    %v99 = vunpack.c.l.b16 %v54
    %v100 = vunpack.c.l.b16 %v55
    %v101 = vunpack.c.l.b16 %v56
    %v102 = vunpack.c.l.b16 %v57
    %v103 = vpack.c.b16 %v88, %v87
    %v104 = vpack.c.b16 %v90, %v89
    %v105 = vpack.c.b16 %v92, %v91
    %v106 = vpack.c.b16 %v94, %v93
    %v107 = vpack.c.b16 %v96, %v95
    %v108 = vpack.c.b16 %v98, %v97
    %v109 = vpack.c.b16 %v100, %v99
    %v110 = vpack.c.b16 %v102, %v101
    %119 = vmatprep.subr.bf16.mxu0 0
    %120 = vmatpush1.bf16.msra.mxu0 %v103
    %121 = vmatprep.subr.bf16.mxu0 0
    %122 = vmatpush1.bf16.msra.mxu0 %v104
    %123 = vmatprep.subr.bf16.mxu0 0
    %124 = vmatpush1.bf16.msra.mxu0 %v105
    %125 = vmatprep.subr.bf16.mxu0 0
    %126 = vmatpush1.bf16.msra.mxu0 %v106
    %127 = vmatprep.subr.bf16.mxu0 0
    %128 = vmatpush1.bf16.msra.mxu0 %v107
    %129 = vmatprep.subr.bf16.mxu0 0
    %130 = vmatpush1.bf16.msra.mxu0 %v108
    %131 = vmatprep.subr.bf16.mxu0 0
    %132 = vmatpush1.bf16.msra.mxu0 %v109
    %133 = vmatprep.subr.bf16.mxu0 0
    %134 = vmatpush1.bf16.msra.mxu0 %v110
    %135 = vmatprep.subr.bf16.mxu0 0
    %136 = vmatpush1.bf16.msra.mxu0 0
    %137 = vmatprep.subr.bf16.mxu0 0
    %138 = vmatpush1.bf16.msra.mxu0 0
    %139 = vmatprep.subr.bf16.mxu0 0
    %140 = vmatpush1.bf16.msra.mxu0 0
    %141 = vmatprep.subr.bf16.mxu0 0
    %142 = vmatpush1.bf16.msra.mxu0 0
    %143 = vmatprep.subr.bf16.mxu0 0
    %144 = vmatpush1.bf16.msra.mxu0 0
    %145 = vmatprep.subr.bf16.mxu0 0
    %146 = vmatpush1.bf16.msra.mxu0 0
    %147 = vmatprep.subr.bf16.mxu0 0
    %148 = vmatpush1.bf16.msra.mxu0 0
    %149 = vmatprep.subr.bf16.mxu0 0
    %150 = vmatpush1.bf16.msra.mxu0 0
    %151 = vmatprep.mubr.bf16.mxu0 0
    %152 = vmatmul.mubr.bf16.gmra.mrb[0].mxu0 %v69
    %v153 = vpop.f32.mrb[0].mxu0
    %v154 = vadd.f32 %v63, %v153
    %v155 = vpop.f32.mrb[0].mxu0
    %v156 = vpop.f32.mrb[0].mxu0
    %v157 = vadd.f32 %v63, %v156
    %v158 = vpop.f32.mrb[0].mxu0
    %159 = vdwg.mxu0
    %v160 = vmax.f32 %v154, 0.0
    %v161 = vmax.f32 %v157, 0.0
    %v162 = vpack.c.bf16 %v161, %v160
    %v163 = vld [vmem:[%s3] sm:$0xff]
    %v164 = vld [vmem:[%s3 + $0x8] sm:$0xff]
    %v165 = vld [vmem:[%s3 + $0x10] sm:$0xff]
    %v166 = vld [vmem:[%s3 + $0x18] sm:$0xff]
    %v167 = vld [vmem:[%s3 + $0x20] sm:$0xff]
    %v168 = vld [vmem:[%s3 + $0x28] sm:$0xff]
    %v169 = vld [vmem:[%s3 + $0x30] sm:$0xff]
    %v170 = vld [vmem:[%s3 + $0x38] sm:$0xff]
    %v171 = vld [vmem:[%s3 + $0x40] sm:$0xff]
    %v172 = vld [vmem:[%s3 + $0x48] sm:$0xff]
    %v173 = vld [vmem:[%s3 + $0x50] sm:$0xff]
    %v174 = vld [vmem:[%s3 + $0x58] sm:$0xff]
    %v175 = vld [vmem:[%s3 + $0x60] sm:$0xff]
    %v176 = vld [vmem:[%s3 + $0x68] sm:$0xff]
    %v177 = vld [vmem:[%s3 + $0x70] sm:$0xff]
    %v178 = vld [vmem:[%s3 + $0x78] sm:$0xff]
    %v179 = vld [vmem:[%s4] sm:$0x3]
    %v181 = vlaneseq
    %v182 = vshrl.u32 %v181, 7
    %v183 = vsub.s32 0, %v182
    %v184 = vrot.slane %v179, %v183
    %v185 = vlaneseq
    %v186 = vshrl.u32 %v185, 7
    %v187 = vsub.s32 1, %v186
    %v188 = vrot.slane %v179, %v187
    %v207 = vunpack.c.l.b16 %v163
    %v208 = vunpack.c.h.b16 %v163
    %v209 = vunpack.c.l.b16 %v164
    %v210 = vunpack.c.h.b16 %v164
    %v211 = vunpack.c.l.b16 %v165
    %v212 = vunpack.c.h.b16 %v165
    %v213 = vunpack.c.l.b16 %v166
    %v214 = vunpack.c.h.b16 %v166
    %v215 = vunpack.c.l.b16 %v167
    %v216 = vunpack.c.h.b16 %v167
    %v217 = vunpack.c.l.b16 %v168
    %v218 = vunpack.c.h.b16 %v168
    %v219 = vunpack.c.l.b16 %v169
    %v220 = vunpack.c.h.b16 %v169
    %v221 = vunpack.c.l.b16 %v170
    %v222 = vunpack.c.h.b16 %v170
    %v223 = vunpack.c.l.b16 %v171
    %v224 = vunpack.c.h.b16 %v171
    %v225 = vunpack.c.l.b16 %v172
    %v226 = vunpack.c.h.b16 %v172
    %v227 = vunpack.c.l.b16 %v173
    %v228 = vunpack.c.h.b16 %v173
    %v229 = vunpack.c.l.b16 %v174
    %v230 = vunpack.c.h.b16 %v174
    %v231 = vunpack.c.l.b16 %v175
    %v232 = vunpack.c.h.b16 %v175
    %v233 = vunpack.c.l.b16 %v176
    %v234 = vunpack.c.h.b16 %v176
    %v235 = vunpack.c.l.b16 %v177
    %v236 = vunpack.c.h.b16 %v177
    %v237 = vunpack.c.l.b16 %v178
    %v238 = vunpack.c.h.b16 %v178
    %v239 = vpack.c.b16 %v209, %v207
    %v240 = vpack.c.b16 %v210, %v208
    %v241 = vpack.c.b16 %v213, %v211
    %v242 = vpack.c.b16 %v214, %v212
    %v243 = vpack.c.b16 %v217, %v215
    %v244 = vpack.c.b16 %v218, %v216
    %v245 = vpack.c.b16 %v221, %v219
    %v246 = vpack.c.b16 %v222, %v220
    %v247 = vpack.c.b16 %v225, %v223
    %v248 = vpack.c.b16 %v226, %v224
    %v249 = vpack.c.b16 %v229, %v227
    %v250 = vpack.c.b16 %v230, %v228
    %v251 = vpack.c.b16 %v233, %v231
    %v252 = vpack.c.b16 %v234, %v232
    %v253 = vpack.c.b16 %v237, %v235
    %v254 = vpack.c.b16 %v238, %v236
    %271 = vmatprep.subr.bf16.mxu0 %v240
    %272 = vmatpush1.bf16.msra.mxu0 %v239
    %273 = vmatprep.subr.bf16.mxu0 %v242
    %274 = vmatpush1.bf16.msra.mxu0 %v241
    %275 = vmatprep.subr.bf16.mxu0 %v244
    %276 = vmatpush1.bf16.msra.mxu0 %v243
    %277 = vmatprep.subr.bf16.mxu0 %v246
    %278 = vmatpush1.bf16.msra.mxu0 %v245
    %279 = vmatprep.subr.bf16.mxu0 %v248
    %280 = vmatpush1.bf16.msra.mxu0 %v247
    %281 = vmatprep.subr.bf16.mxu0 %v250
    %282 = vmatpush1.bf16.msra.mxu0 %v249
    %283 = vmatprep.subr.bf16.mxu0 %v252
    %284 = vmatpush1.bf16.msra.mxu0 %v251
    %285 = vmatprep.subr.bf16.mxu0 %v254
    %286 = vmatpush1.bf16.msra.mxu0 %v253
    %287 = vmatprep.subr.bf16.mxu0 0
    %288 = vmatpush1.bf16.msra.mxu0 0
    %289 = vmatprep.subr.bf16.mxu0 0
    %290 = vmatpush1.bf16.msra.mxu0 0
    %291 = vmatprep.subr.bf16.mxu0 0
    %292 = vmatpush1.bf16.msra.mxu0 0
    %293 = vmatprep.subr.bf16.mxu0 0
    %294 = vmatpush1.bf16.msra.mxu0 0
    %295 = vmatprep.subr.bf16.mxu0 0
    %296 = vmatpush1.bf16.msra.mxu0 0
    %297 = vmatprep.subr.bf16.mxu0 0
    %298 = vmatpush1.bf16.msra.mxu0 0
    %299 = vmatprep.subr.bf16.mxu0 0
    %300 = vmatpush1.bf16.msra.mxu0 0
    %301 = vmatprep.subr.bf16.mxu0 0
    %302 = vmatpush1.bf16.msra.mxu0 0
    %303 = vmatprep.mubr.bf16.mxu0 0
    %304 = vmatmul.mubr.bf16.gmra.mrb[0].mxu0 %v162
    %v305 = vpop.f32.mrb[0].mxu0
    %v306 = vadd.f32 %v184, %v305
    %v307 = vpop.f32.mrb[0].mxu0
    %v308 = vadd.f32 %v188, %v307
    %v309 = vpop.f32.mrb[0].mxu0
    %v310 = vadd.f32 %v184, %v309
    %v311 = vpop.f32.mrb[0].mxu0
    %v312 = vadd.f32 %v188, %v311
    %313 = vdwg.mxu0
    %v314 = vmax.f32 %v306, 0.0
    %v315 = vmax.f32 %v308, 0.0
    %v316 = vmax.f32 %v310, 0.0
    %v317 = vmax.f32 %v312, 0.0
    %v318 = vpack.c.bf16 %v316, %v314
    %v319 = vpack.c.bf16 %v317, %v315
    %v320 = vld [vmem:[%s5] sm:$0xff]
    %v321 = vld [vmem:[%s5 + $0x8] sm:$0xff]
    %v322 = vld [vmem:[%s5 + $0x10] sm:$0xff]
    %v323 = vld [vmem:[%s5 + $0x18] sm:$0xff]
    %v324 = vld [vmem:[%s5 + $0x20] sm:$0xff]
    %v325 = vld [vmem:[%s5 + $0x28] sm:$0xff]
    %v326 = vld [vmem:[%s5 + $0x30] sm:$0xff]
    %v327 = vld [vmem:[%s5 + $0x38] sm:$0xff]
    %v328 = vld [vmem:[%s5 + $0x40] sm:$0xff]
    %v329 = vld [vmem:[%s5 + $0x48] sm:$0xff]
    %v330 = vld [vmem:[%s5 + $0x50] sm:$0xff]
    %v331 = vld [vmem:[%s5 + $0x58] sm:$0xff]
    %v332 = vld [vmem:[%s5 + $0x60] sm:$0xff]
    %v333 = vld [vmem:[%s5 + $0x68] sm:$0xff]
    %v334 = vld [vmem:[%s5 + $0x70] sm:$0xff]
    %v335 = vld [vmem:[%s5 + $0x78] sm:$0xff]
    %v336 = vld [vmem:[%s5 + $0x80] sm:$0xff]
    %v337 = vld [vmem:[%s5 + $0x88] sm:$0xff]
    %v338 = vld [vmem:[%s5 + $0x90] sm:$0xff]
    %v339 = vld [vmem:[%s5 + $0x98] sm:$0xff]
    %v340 = vld [vmem:[%s5 + $0xa0] sm:$0xff]
    %v341 = vld [vmem:[%s5 + $0xa8] sm:$0xff]
    %v342 = vld [vmem:[%s5 + $0xb0] sm:$0xff]
    %v343 = vld [vmem:[%s5 + $0xb8] sm:$0xff]
    %v344 = vld [vmem:[%s5 + $0xc0] sm:$0xff]
    %v345 = vld [vmem:[%s5 + $0xc8] sm:$0xff]
    %v346 = vld [vmem:[%s5 + $0xd0] sm:$0xff]
    %v347 = vld [vmem:[%s5 + $0xd8] sm:$0xff]
    %v348 = vld [vmem:[%s5 + $0xe0] sm:$0xff]
    %v349 = vld [vmem:[%s5 + $0xe8] sm:$0xff]
    %v350 = vld [vmem:[%s5 + $0xf0] sm:$0xff]
    %v351 = vld [vmem:[%s5 + $0xf8] sm:$0xff]
    %v352 = vld [vmem:[%s6] sm:$0x3]
    %v354 = vlaneseq
    %v355 = vshrl.u32 %v354, 7
    %v356 = vsub.s32 0, %v355
    %v357 = vrot.slane %v352, %v356
    %v358 = vlaneseq
    %v359 = vshrl.u32 %v358, 7
    %v360 = vsub.s32 1, %v359
    %v361 = vrot.slane %v352, %v360
    %v396 = vunpack.c.l.b16 %v320
    %v397 = vunpack.c.h.b16 %v320
    %v398 = vunpack.c.l.b16 %v321
    %v399 = vunpack.c.h.b16 %v321
    %v400 = vunpack.c.l.b16 %v322
    %v401 = vunpack.c.h.b16 %v322
    %v402 = vunpack.c.l.b16 %v323
    %v403 = vunpack.c.h.b16 %v323
    %v404 = vunpack.c.l.b16 %v324
    %v405 = vunpack.c.h.b16 %v324
    %v406 = vunpack.c.l.b16 %v325
    %v407 = vunpack.c.h.b16 %v325
    %v408 = vunpack.c.l.b16 %v326
    %v409 = vunpack.c.h.b16 %v326
    %v410 = vunpack.c.l.b16 %v327
    %v411 = vunpack.c.h.b16 %v327
    %v412 = vunpack.c.l.b16 %v328
    %v413 = vunpack.c.h.b16 %v328
    %v414 = vunpack.c.l.b16 %v329
    %v415 = vunpack.c.h.b16 %v329
    %v416 = vunpack.c.l.b16 %v330
    %v417 = vunpack.c.h.b16 %v330
    %v418 = vunpack.c.l.b16 %v331
    %v419 = vunpack.c.h.b16 %v331
    %v420 = vunpack.c.l.b16 %v332
    %v421 = vunpack.c.h.b16 %v332
    %v422 = vunpack.c.l.b16 %v333
    %v423 = vunpack.c.h.b16 %v333
    %v424 = vunpack.c.l.b16 %v334
    %v425 = vunpack.c.h.b16 %v334
    %v426 = vunpack.c.l.b16 %v335
    %v427 = vunpack.c.h.b16 %v335
    %v428 = vunpack.c.l.b16 %v336
    %v429 = vunpack.c.h.b16 %v336
    %v430 = vunpack.c.l.b16 %v337
    %v431 = vunpack.c.h.b16 %v337
    %v432 = vunpack.c.l.b16 %v338
    %v433 = vunpack.c.h.b16 %v338
    %v434 = vunpack.c.l.b16 %v339
    %v435 = vunpack.c.h.b16 %v339
    %v436 = vunpack.c.l.b16 %v340
    %v437 = vunpack.c.h.b16 %v340
    %v438 = vunpack.c.l.b16 %v341
    %v439 = vunpack.c.h.b16 %v341
    %v440 = vunpack.c.l.b16 %v342
    %v441 = vunpack.c.h.b16 %v342
    %v442 = vunpack.c.l.b16 %v343
    %v443 = vunpack.c.h.b16 %v343
    %v444 = vunpack.c.l.b16 %v344
    %v445 = vunpack.c.h.b16 %v344
    %v446 = vunpack.c.l.b16 %v345
    %v447 = vunpack.c.h.b16 %v345
    %v448 = vunpack.c.l.b16 %v346
    %v449 = vunpack.c.h.b16 %v346
    %v450 = vunpack.c.l.b16 %v347
    %v451 = vunpack.c.h.b16 %v347
    %v452 = vunpack.c.l.b16 %v348
    %v453 = vunpack.c.h.b16 %v348
    %v454 = vunpack.c.l.b16 %v349
    %v455 = vunpack.c.h.b16 %v349
    %v456 = vunpack.c.l.b16 %v350
    %v457 = vunpack.c.h.b16 %v350
    %v458 = vunpack.c.l.b16 %v351
    %v459 = vunpack.c.h.b16 %v351
    %v460 = vpack.c.b16 %v398, %v396
    %v461 = vpack.c.b16 %v399, %v397
    %v462 = vpack.c.b16 %v402, %v400
    %v463 = vpack.c.b16 %v403, %v401
    %v464 = vpack.c.b16 %v406, %v404
    %v465 = vpack.c.b16 %v407, %v405
    %v466 = vpack.c.b16 %v410, %v408
    %v467 = vpack.c.b16 %v411, %v409
    %v468 = vpack.c.b16 %v414, %v412
    %v469 = vpack.c.b16 %v415, %v413
    %v470 = vpack.c.b16 %v418, %v416
    %v471 = vpack.c.b16 %v419, %v417
    %v472 = vpack.c.b16 %v422, %v420
    %v473 = vpack.c.b16 %v423, %v421
    %v474 = vpack.c.b16 %v426, %v424
    %v475 = vpack.c.b16 %v427, %v425
    %v476 = vpack.c.b16 %v430, %v428
    %v477 = vpack.c.b16 %v431, %v429
    %v478 = vpack.c.b16 %v434, %v432
    %v479 = vpack.c.b16 %v435, %v433
    %v480 = vpack.c.b16 %v438, %v436
    %v481 = vpack.c.b16 %v439, %v437
    %v482 = vpack.c.b16 %v442, %v440
    %v483 = vpack.c.b16 %v443, %v441
    %v484 = vpack.c.b16 %v446, %v444
    %v485 = vpack.c.b16 %v447, %v445
    %v486 = vpack.c.b16 %v450, %v448
    %v487 = vpack.c.b16 %v451, %v449
    %v488 = vpack.c.b16 %v454, %v452
    %v489 = vpack.c.b16 %v455, %v453
    %v490 = vpack.c.b16 %v458, %v456
    %v491 = vpack.c.b16 %v459, %v457
    %524 = vmatprep.subr.bf16.mxu0 %v461
    %525 = vmatpush1.bf16.msra.mxu0 %v460
    %526 = vmatprep.subr.bf16.mxu0 %v463
    %527 = vmatpush1.bf16.msra.mxu0 %v462
    %528 = vmatprep.subr.bf16.mxu0 %v465
    %529 = vmatpush1.bf16.msra.mxu0 %v464
    %530 = vmatprep.subr.bf16.mxu0 %v467
    %531 = vmatpush1.bf16.msra.mxu0 %v466
    %532 = vmatprep.subr.bf16.mxu0 %v469
    %533 = vmatpush1.bf16.msra.mxu0 %v468
    %534 = vmatprep.subr.bf16.mxu0 %v471
    %535 = vmatpush1.bf16.msra.mxu0 %v470
    %536 = vmatprep.subr.bf16.mxu0 %v473
    %537 = vmatpush1.bf16.msra.mxu0 %v472
    %538 = vmatprep.subr.bf16.mxu0 %v475
    %539 = vmatpush1.bf16.msra.mxu0 %v474
    %540 = vmatprep.subr.bf16.mxu0 %v477
    %541 = vmatpush1.bf16.msra.mxu0 %v476
    %542 = vmatprep.subr.bf16.mxu0 %v479
    %543 = vmatpush1.bf16.msra.mxu0 %v478
    %544 = vmatprep.subr.bf16.mxu0 %v481
    %545 = vmatpush1.bf16.msra.mxu0 %v480
    %546 = vmatprep.subr.bf16.mxu0 %v483
    %547 = vmatpush1.bf16.msra.mxu0 %v482
    %548 = vmatprep.subr.bf16.mxu0 %v485
    %549 = vmatpush1.bf16.msra.mxu0 %v484
    %550 = vmatprep.subr.bf16.mxu0 %v487
    %551 = vmatpush1.bf16.msra.mxu0 %v486
    %552 = vmatprep.subr.bf16.mxu0 %v489
    %553 = vmatpush1.bf16.msra.mxu0 %v488
    %554 = vmatprep.subr.bf16.mxu0 %v491
    %555 = vmatpush1.bf16.msra.mxu0 %v490
    %556 = vmatprep.mubr.bf16.mxu0 %v319
    %557 = vmatmul.mubr.bf16.gmra.mrb[0].mxu0 %v318
    %v558 = vpop.f32.mrb[0].mxu0
    %v559 = vadd.f32 %v357, %v558
    %v560 = vpop.f32.mrb[0].mxu0
    %v561 = vadd.f32 %v361, %v560
    %v562 = vpop.f32.mrb[0].mxu0
    %v563 = vadd.f32 %v357, %v562
    %v564 = vpop.f32.mrb[0].mxu0
    %v565 = vadd.f32 %v361, %v564
    %566 = vdwg.mxu0
    %v567 = vmax.f32 %v559, 0.0
    %v568 = vmax.f32 %v561, 0.0
    %v569 = vmax.f32 %v563, 0.0
    %v570 = vmax.f32 %v565, 0.0
    %v571 = vpack.c.bf16 %v569, %v567
    %v572 = vpack.c.bf16 %v570, %v568
    %v573 = vld [vmem:[%s7] sm:$0xf]
    %v574 = vld [vmem:[%s7 + $0x1c] sm:$0xf]
    %v575 = vld [vmem:[%s7 + $0x38] sm:$0xf]
    %v576 = vld [vmem:[%s7 + $0x54] sm:$0xf]
    %v577 = vld [vmem:[%s7 + $0x70] sm:$0xf]
    %v578 = vld [vmem:[%s7 + $0x8c] sm:$0xf]
    %v579 = vld [vmem:[%s7 + $0xa8] sm:$0xf]
    %v580 = vld [vmem:[%s7 + $0xc4] sm:$0xf]
    %v581 = vld [vmem:[%s7 + $0xe0] sm:$0xf]
    %v582 = vld [vmem:[%s7 + $0xfc] sm:$0xf]
    %v583 = vld [vmem:[%s7 + $0x118] sm:$0xf]
    %v584 = vld [vmem:[%s7 + $0x134] sm:$0xf]
    %v585 = vld [vmem:[%s7 + $0x150] sm:$0xf]
    %v586 = vld [vmem:[%s7 + $0x16c] sm:$0xf]
    %v587 = vld [vmem:[%s7 + $0x188] sm:$0xf]
    %v588 = vld [vmem:[%s7 + $0x1a4] sm:$0xf]
    %v589 = vld [vmem:[%s7 + $0x1c0] sm:$0xf]
    %v590 = vld [vmem:[%s7 + $0x1dc] sm:$0xf]
    %v591 = vld [vmem:[%s7 + $0x1f8] sm:$0xf]
    %v592 = vld [vmem:[%s7 + $0x214] sm:$0xf]
    %v593 = vld [vmem:[%s7 + $0x230] sm:$0xf]
    %v594 = vld [vmem:[%s7 + $0x24c] sm:$0xf]
    %v595 = vld [vmem:[%s7 + $0x268] sm:$0xf]
    %v596 = vld [vmem:[%s7 + $0x284] sm:$0xf]
    %v597 = vld [vmem:[%s7 + $0x2a0] sm:$0xf]
    %v598 = vld [vmem:[%s7 + $0x2bc] sm:$0xf]
    %v599 = vld [vmem:[%s7 + $0x2d8] sm:$0xf]
    %v600 = vld [vmem:[%s7 + $0x2f4] sm:$0xf]
    %v601 = vld [vmem:[%s7 + $0x310] sm:$0xf]
    %v602 = vld [vmem:[%s7 + $0x32c] sm:$0xf]
    %v603 = vld [vmem:[%s7 + $0x348] sm:$0xf]
    %v604 = vld [vmem:[%s7 + $0x364] sm:$0xf]
    %v605 = vld [vmem:[%s8] sm:$0x1]
    %v607 = vlaneseq
    %v608 = vshrl.u32 %v607, 7
    %v609 = vsub.s32 0, %v608
    %v610 = vrot.slane %v605, %v609
    %v644 = vunpack.c.l.b16 %v573
    %v645 = vunpack.c.l.b16 %v574
    %v646 = vunpack.c.l.b16 %v575
    %v647 = vunpack.c.l.b16 %v576
    %v648 = vunpack.c.l.b16 %v577
    %v649 = vunpack.c.l.b16 %v578
    %v650 = vunpack.c.l.b16 %v579
    %v651 = vunpack.c.l.b16 %v580
    %v652 = vunpack.c.l.b16 %v581
    %v653 = vunpack.c.l.b16 %v582
    %v654 = vunpack.c.l.b16 %v583
    %v655 = vunpack.c.l.b16 %v584
    %v656 = vunpack.c.l.b16 %v585
    %v657 = vunpack.c.l.b16 %v586
    %v658 = vunpack.c.l.b16 %v587
    %v659 = vunpack.c.l.b16 %v588
    %v660 = vunpack.c.l.b16 %v589
    %v661 = vunpack.c.l.b16 %v590
    %v662 = vunpack.c.l.b16 %v591
    %v663 = vunpack.c.l.b16 %v592
    %v664 = vunpack.c.l.b16 %v593
    %v665 = vunpack.c.l.b16 %v594
    %v666 = vunpack.c.l.b16 %v595
    %v667 = vunpack.c.l.b16 %v596
    %v668 = vunpack.c.l.b16 %v597
    %v669 = vunpack.c.l.b16 %v598
    %v670 = vunpack.c.l.b16 %v599
    %v671 = vunpack.c.l.b16 %v600
    %v672 = vunpack.c.l.b16 %v601
    %v673 = vunpack.c.l.b16 %v602
    %v674 = vunpack.c.l.b16 %v603
    %v675 = vunpack.c.l.b16 %v604
    %v676 = vpack.c.b16 %v645, %v644
    %v677 = vpack.c.b16 %v647, %v646
    %v678 = vpack.c.b16 %v649, %v648
    %v679 = vpack.c.b16 %v651, %v650
    %v680 = vpack.c.b16 %v653, %v652
    %v681 = vpack.c.b16 %v655, %v654
    %v682 = vpack.c.b16 %v657, %v656
    %v683 = vpack.c.b16 %v659, %v658
    %v684 = vpack.c.b16 %v661, %v660
    %v685 = vpack.c.b16 %v663, %v662
    %v686 = vpack.c.b16 %v665, %v664
    %v687 = vpack.c.b16 %v667, %v666
    %v688 = vpack.c.b16 %v669, %v668
    %v689 = vpack.c.b16 %v671, %v670
    %v690 = vpack.c.b16 %v673, %v672
    %v691 = vpack.c.b16 %v675, %v674
    %708 = vmatprep.subr.bf16.mxu0 0
    %709 = vmatpush1.bf16.msra.mxu0 %v676
    %710 = vmatprep.subr.bf16.mxu0 0
    %711 = vmatpush1.bf16.msra.mxu0 %v677
    %712 = vmatprep.subr.bf16.mxu0 0
    %713 = vmatpush1.bf16.msra.mxu0 %v678
    %714 = vmatprep.subr.bf16.mxu0 0
    %715 = vmatpush1.bf16.msra.mxu0 %v679
    %716 = vmatprep.subr.bf16.mxu0 0
    %717 = vmatpush1.bf16.msra.mxu0 %v680
    %718 = vmatprep.subr.bf16.mxu0 0
    %719 = vmatpush1.bf16.msra.mxu0 %v681
    %720 = vmatprep.subr.bf16.mxu0 0
    %721 = vmatpush1.bf16.msra.mxu0 %v682
    %722 = vmatprep.subr.bf16.mxu0 0
    %723 = vmatpush1.bf16.msra.mxu0 %v683
    %724 = vmatprep.subr.bf16.mxu0 0
    %725 = vmatpush1.bf16.msra.mxu0 %v684
    %726 = vmatprep.subr.bf16.mxu0 0
    %727 = vmatpush1.bf16.msra.mxu0 %v685
    %728 = vmatprep.subr.bf16.mxu0 0
    %729 = vmatpush1.bf16.msra.mxu0 %v686
    %730 = vmatprep.subr.bf16.mxu0 0
    %731 = vmatpush1.bf16.msra.mxu0 %v687
    %732 = vmatprep.subr.bf16.mxu0 0
    %733 = vmatpush1.bf16.msra.mxu0 %v688
    %734 = vmatprep.subr.bf16.mxu0 0
    %735 = vmatpush1.bf16.msra.mxu0 %v689
    %736 = vmatprep.subr.bf16.mxu0 0
    %737 = vmatpush1.bf16.msra.mxu0 %v690
    %738 = vmatprep.subr.bf16.mxu0 0
    %739 = vmatpush1.bf16.msra.mxu0 %v691
    %740 = vmatprep.mubr.bf16.mxu0 %v572
    %741 = vmatmul.mubr.bf16.gmra.mrb[0].mxu0 %v571
    %v742 = vpop.f32.mrb[0].mxu0
    %v743 = vadd.f32 %v610, %v742
    %v744 = vpop.f32.mrb[0].mxu0
    %v745 = vpop.f32.mrb[0].mxu0
    %v746 = vadd.f32 %v610, %v745
    %v747 = vpop.f32.mrb[0].mxu0
    %748 = vdwg.mxu0
    %v749 = vmax.f32 %v743, 0.0
    %v750 = vmax.f32 %v746, 0.0
    %v751 = vpack.c.bf16 %v750, %v749
    %v752 = vld [vmem:[%s9] sm:$0xf]
    %v753 = vld [vmem:[%s9 + $0x4] sm:$0xf]
    %v754 = vld [vmem:[%s9 + $0x8] sm:$0xf]
    %v755 = vld [vmem:[%s9 + $0xc] sm:$0xf]
    %v756 = vld [vmem:[%s9 + $0x10] sm:$0xf]
    %v757 = vld [vmem:[%s9 + $0x14] sm:$0xf]
    %v758 = vld [vmem:[%s9 + $0x18] sm:$0xf]
    %v759 = vld [vmem:[%s9 + $0x1c] sm:$0xf]
    %v760 = vld [vmem:[%s9 + $0x20] sm:$0xf]
    %v761 = vld [vmem:[%s9 + $0x24] sm:$0xf]
    %v762 = vld [vmem:[%s9 + $0x28] sm:$0xf]
    %v763 = vld [vmem:[%s9 + $0x2c] sm:$0xf]
    %v764 = vld [vmem:[%s9 + $0x30] sm:$0xf]
    %v765 = vld [vmem:[%s9 + $0x34] sm:$0xf]
    %v766 = vld [vmem:[%s9 + $0x38] sm:$0xf]
    %v767 = vld [vmem:[%s9 + $0x3c] sm:$0xf]
    %v768 = vld [vmem:[%s7 + $0x4] sm:$0xf]
    %v769 = vld [vmem:[%s7 + $0x20] sm:$0xf]
    %v770 = vld [vmem:[%s7 + $0x3c] sm:$0xf]
    %v771 = vld [vmem:[%s7 + $0x58] sm:$0xf]
    %v772 = vld [vmem:[%s7 + $0x74] sm:$0xf]
    %v773 = vld [vmem:[%s7 + $0x90] sm:$0xf]
    %v774 = vld [vmem:[%s7 + $0xac] sm:$0xf]
    %v775 = vld [vmem:[%s7 + $0xc8] sm:$0xf]
    %v776 = vld [vmem:[%s7 + $0xe4] sm:$0xf]
    %v777 = vld [vmem:[%s7 + $0x100] sm:$0xf]
    %v778 = vld [vmem:[%s7 + $0x11c] sm:$0xf]
    %v779 = vld [vmem:[%s7 + $0x138] sm:$0xf]
    %v780 = vld [vmem:[%s7 + $0x154] sm:$0xf]
    %v781 = vld [vmem:[%s7 + $0x170] sm:$0xf]
    %v782 = vld [vmem:[%s7 + $0x18c] sm:$0xf]
    %v783 = vld [vmem:[%s7 + $0x1a8] sm:$0xf]
    %v784 = vld [vmem:[%s7 + $0x1c4] sm:$0xf]
    %v785 = vld [vmem:[%s7 + $0x1e0] sm:$0xf]
    %v786 = vld [vmem:[%s7 + $0x1fc] sm:$0xf]
    %v787 = vld [vmem:[%s7 + $0x218] sm:$0xf]
    %v788 = vld [vmem:[%s7 + $0x234] sm:$0xf]
    %v789 = vld [vmem:[%s7 + $0x250] sm:$0xf]
    %v790 = vld [vmem:[%s7 + $0x26c] sm:$0xf]
    %v791 = vld [vmem:[%s7 + $0x288] sm:$0xf]
    %v792 = vld [vmem:[%s7 + $0x2a4] sm:$0xf]
    %v793 = vld [vmem:[%s7 + $0x2c0] sm:$0xf]
    %v794 = vld [vmem:[%s7 + $0x2dc] sm:$0xf]
    %v795 = vld [vmem:[%s7 + $0x2f8] sm:$0xf]
    %v796 = vld [vmem:[%s7 + $0x314] sm:$0xf]
    %v797 = vld [vmem:[%s7 + $0x330] sm:$0xf]
    %v798 = vld [vmem:[%s7 + $0x34c] sm:$0xf]
    %v799 = vld [vmem:[%s7 + $0x368] sm:$0xf]
    %v800 = vld [vmem:[%s8 + $0x1] sm:$0x1]
    %v802 = vlaneseq
    %v803 = vshrl.u32 %v802, 7
    %v804 = vsub.s32 0, %v803
    %v805 = vrot.slane %v800, %v804
    %v839 = vunpack.c.l.b16 %v768
    %v840 = vunpack.c.l.b16 %v769
    %v841 = vunpack.c.l.b16 %v770
    %v842 = vunpack.c.l.b16 %v771
    %v843 = vunpack.c.l.b16 %v772
    %v844 = vunpack.c.l.b16 %v773
    %v845 = vunpack.c.l.b16 %v774
    %v846 = vunpack.c.l.b16 %v775
    %v847 = vunpack.c.l.b16 %v776
    %v848 = vunpack.c.l.b16 %v777
    %v849 = vunpack.c.l.b16 %v778
    %v850 = vunpack.c.l.b16 %v779
    %v851 = vunpack.c.l.b16 %v780
    %v852 = vunpack.c.l.b16 %v781
    %v853 = vunpack.c.l.b16 %v782
    %v854 = vunpack.c.l.b16 %v783
    %v855 = vunpack.c.l.b16 %v784
    %v856 = vunpack.c.l.b16 %v785
    %v857 = vunpack.c.l.b16 %v786
    %v858 = vunpack.c.l.b16 %v787
    %v859 = vunpack.c.l.b16 %v788
    %v860 = vunpack.c.l.b16 %v789
    %v861 = vunpack.c.l.b16 %v790
    %v862 = vunpack.c.l.b16 %v791
    %v863 = vunpack.c.l.b16 %v792
    %v864 = vunpack.c.l.b16 %v793
    %v865 = vunpack.c.l.b16 %v794
    %v866 = vunpack.c.l.b16 %v795
    %v867 = vunpack.c.l.b16 %v796
    %v868 = vunpack.c.l.b16 %v797
    %v869 = vunpack.c.l.b16 %v798
    %v870 = vunpack.c.l.b16 %v799
    %v871 = vpack.c.b16 %v840, %v839
    %v872 = vpack.c.b16 %v842, %v841
    %v873 = vpack.c.b16 %v844, %v843
    %v874 = vpack.c.b16 %v846, %v845
    %v875 = vpack.c.b16 %v848, %v847
    %v876 = vpack.c.b16 %v850, %v849
    %v877 = vpack.c.b16 %v852, %v851
    %v878 = vpack.c.b16 %v854, %v853
    %v879 = vpack.c.b16 %v856, %v855
    %v880 = vpack.c.b16 %v858, %v857
    %v881 = vpack.c.b16 %v860, %v859
    %v882 = vpack.c.b16 %v862, %v861
    %v883 = vpack.c.b16 %v864, %v863
    %v884 = vpack.c.b16 %v866, %v865
    %v885 = vpack.c.b16 %v868, %v867
    %v886 = vpack.c.b16 %v870, %v869
    %903 = vmatprep.subr.bf16.mxu0 0
    %904 = vmatpush1.bf16.msra.mxu0 %v871
    %905 = vmatprep.subr.bf16.mxu0 0
    %906 = vmatpush1.bf16.msra.mxu0 %v872
    %907 = vmatprep.subr.bf16.mxu0 0
    %908 = vmatpush1.bf16.msra.mxu0 %v873
    %909 = vmatprep.subr.bf16.mxu0 0
    %910 = vmatpush1.bf16.msra.mxu0 %v874
    %911 = vmatprep.subr.bf16.mxu0 0
    %912 = vmatpush1.bf16.msra.mxu0 %v875
    %913 = vmatprep.subr.bf16.mxu0 0
    %914 = vmatpush1.bf16.msra.mxu0 %v876
    %915 = vmatprep.subr.bf16.mxu0 0
    %916 = vmatpush1.bf16.msra.mxu0 %v877
    %917 = vmatprep.subr.bf16.mxu0 0
    %918 = vmatpush1.bf16.msra.mxu0 %v878
    %919 = vmatprep.subr.bf16.mxu0 0
    %920 = vmatpush1.bf16.msra.mxu0 %v879
    %921 = vmatprep.subr.bf16.mxu0 0
    %922 = vmatpush1.bf16.msra.mxu0 %v880
    %923 = vmatprep.subr.bf16.mxu0 0
    %924 = vmatpush1.bf16.msra.mxu0 %v881
    %925 = vmatprep.subr.bf16.mxu0 0
    %926 = vmatpush1.bf16.msra.mxu0 %v882
    %927 = vmatprep.subr.bf16.mxu0 0
    %928 = vmatpush1.bf16.msra.mxu0 %v883
    %929 = vmatprep.subr.bf16.mxu0 0
    %930 = vmatpush1.bf16.msra.mxu0 %v884
    %931 = vmatprep.subr.bf16.mxu0 0
    %932 = vmatpush1.bf16.msra.mxu0 %v885
    %933 = vmatprep.subr.bf16.mxu0 0
    %934 = vmatpush1.bf16.msra.mxu0 %v886
    %935 = vmatprep.mubr.bf16.mxu0 %v572
    %936 = vmatmul.mubr.bf16.gmra.mrb[0].mxu0 %v571
    %v937 = vpop.f32.mrb[0].mxu0
    %v938 = vadd.f32 %v805, %v937
    %v939 = vpop.f32.mrb[0].mxu0
    %v940 = vpop.f32.mrb[0].mxu0
    %v941 = vadd.f32 %v805, %v940
    %v942 = vpop.f32.mrb[0].mxu0
    %943 = vdwg.mxu0
    %v944 = vmax.f32 %v938, 0.0
    %v945 = vmax.f32 %v941, 0.0
    %v946 = vpack.c.bf16 %v945, %v944
    %v947 = vld [vmem:[%s9 + $0x40] sm:$0xf]
    %v948 = vld [vmem:[%s9 + $0x44] sm:$0xf]
    %v949 = vld [vmem:[%s9 + $0x48] sm:$0xf]
    %v950 = vld [vmem:[%s9 + $0x4c] sm:$0xf]
    %v951 = vld [vmem:[%s9 + $0x50] sm:$0xf]
    %v952 = vld [vmem:[%s9 + $0x54] sm:$0xf]
    %v953 = vld [vmem:[%s9 + $0x58] sm:$0xf]
    %v954 = vld [vmem:[%s9 + $0x5c] sm:$0xf]
    %v955 = vld [vmem:[%s9 + $0x60] sm:$0xf]
    %v956 = vld [vmem:[%s9 + $0x64] sm:$0xf]
    %v957 = vld [vmem:[%s9 + $0x68] sm:$0xf]
    %v958 = vld [vmem:[%s9 + $0x6c] sm:$0xf]
    %v959 = vld [vmem:[%s9 + $0x70] sm:$0xf]
    %v960 = vld [vmem:[%s9 + $0x74] sm:$0xf]
    %v961 = vld [vmem:[%s9 + $0x78] sm:$0xf]
    %v962 = vld [vmem:[%s9 + $0x7c] sm:$0xf]
    %v979 = vunpack.c.l.b16 %v947
    %v980 = vunpack.c.l.b16 %v948
    %v981 = vunpack.c.l.b16 %v949
    %v982 = vunpack.c.l.b16 %v950
    %v983 = vunpack.c.l.b16 %v951
    %v984 = vunpack.c.l.b16 %v952
    %v985 = vunpack.c.l.b16 %v953
    %v986 = vunpack.c.l.b16 %v954
    %v987 = vunpack.c.l.b16 %v955
    %v988 = vunpack.c.l.b16 %v956
    %v989 = vunpack.c.l.b16 %v957
    %v990 = vunpack.c.l.b16 %v958
    %v991 = vunpack.c.l.b16 %v959
    %v992 = vunpack.c.l.b16 %v960
    %v993 = vunpack.c.l.b16 %v961
    %v994 = vunpack.c.l.b16 %v962
    %v995 = vpack.c.b16 %v980, %v979
    %v996 = vpack.c.b16 %v982, %v981
    %v997 = vpack.c.b16 %v984, %v983
    %v998 = vpack.c.b16 %v986, %v985
    %v999 = vpack.c.b16 %v988, %v987
    %v1000 = vpack.c.b16 %v990, %v989
    %v1001 = vpack.c.b16 %v992, %v991
    %v1002 = vpack.c.b16 %v994, %v993
    %1011 = vmatprep.subr.bf16.mxu0 0
    %1012 = vmatpush1.bf16.msra.mxu0 %v995
    %1013 = vmatprep.subr.bf16.mxu0 0
    %1014 = vmatpush1.bf16.msra.mxu0 %v996
    %1015 = vmatprep.subr.bf16.mxu0 0
    %1016 = vmatpush1.bf16.msra.mxu0 %v997
    %1017 = vmatprep.subr.bf16.mxu0 0
    %1018 = vmatpush1.bf16.msra.mxu0 %v998
    %1019 = vmatprep.subr.bf16.mxu0 0
    %1020 = vmatpush1.bf16.msra.mxu0 %v999
    %1021 = vmatprep.subr.bf16.mxu0 0
    %1022 = vmatpush1.bf16.msra.mxu0 %v1000
    %1023 = vmatprep.subr.bf16.mxu0 0
    %1024 = vmatpush1.bf16.msra.mxu0 %v1001
    %1025 = vmatprep.subr.bf16.mxu0 0
    %1026 = vmatpush1.bf16.msra.mxu0 %v1002
    %1027 = vmatprep.subr.bf16.mxu0 0
    %1028 = vmatpush1.bf16.msra.mxu0 0
    %1029 = vmatprep.subr.bf16.mxu0 0
    %1030 = vmatpush1.bf16.msra.mxu0 0
    %1031 = vmatprep.subr.bf16.mxu0 0
    %1032 = vmatpush1.bf16.msra.mxu0 0
    %1033 = vmatprep.subr.bf16.mxu0 0
    %1034 = vmatpush1.bf16.msra.mxu0 0
    %1035 = vmatprep.subr.bf16.mxu0 0
    %1036 = vmatpush1.bf16.msra.mxu0 0
    %1037 = vmatprep.subr.bf16.mxu0 0
    %1038 = vmatpush1.bf16.msra.mxu0 0
    %1039 = vmatprep.subr.bf16.mxu0 0
    %1040 = vmatpush1.bf16.msra.mxu0 0
    %1041 = vmatprep.subr.bf16.mxu0 0
    %1042 = vmatpush1.bf16.msra.mxu0 0
    %1043 = vmatprep.mubr.bf16.mxu0 0
    %1044 = vmatmul.mubr.bf16.gmra.mrb[0].mxu0 %v946
    %v1045 = vpop.f32.mrb[0].mxu0
    %v1046 = vadd.f32 0.0, %v1045
    %v1047 = vpop.f32.mrb[0].mxu0
    %v1048 = vpop.f32.mrb[0].mxu0
    %v1049 = vadd.f32 0.0, %v1048
    %v1050 = vpop.f32.mrb[0].mxu0
    %1051 = vdwg.mxu0
    %v1068 = vunpack.c.l.b16 %v752
    %v1069 = vunpack.c.l.b16 %v753
    %v1070 = vunpack.c.l.b16 %v754
    %v1071 = vunpack.c.l.b16 %v755
    %v1072 = vunpack.c.l.b16 %v756
    %v1073 = vunpack.c.l.b16 %v757
    %v1074 = vunpack.c.l.b16 %v758
    %v1075 = vunpack.c.l.b16 %v759
    %v1076 = vunpack.c.l.b16 %v760
    %v1077 = vunpack.c.l.b16 %v761
    %v1078 = vunpack.c.l.b16 %v762
    %v1079 = vunpack.c.l.b16 %v763
    %v1080 = vunpack.c.l.b16 %v764
    %v1081 = vunpack.c.l.b16 %v765
    %v1082 = vunpack.c.l.b16 %v766
    %v1083 = vunpack.c.l.b16 %v767
    %v1084 = vpack.c.b16 %v1069, %v1068
    %v1085 = vpack.c.b16 %v1071, %v1070
    %v1086 = vpack.c.b16 %v1073, %v1072
    %v1087 = vpack.c.b16 %v1075, %v1074
    %v1088 = vpack.c.b16 %v1077, %v1076
    %v1089 = vpack.c.b16 %v1079, %v1078
    %v1090 = vpack.c.b16 %v1081, %v1080
    %v1091 = vpack.c.b16 %v1083, %v1082
    %1100 = vmatprep.subr.bf16.mxu0 0
    %1101 = vmatpush1.bf16.msra.mxu0 %v1084
    %1102 = vmatprep.subr.bf16.mxu0 0
    %1103 = vmatpush1.bf16.msra.mxu0 %v1085
    %1104 = vmatprep.subr.bf16.mxu0 0
    %1105 = vmatpush1.bf16.msra.mxu0 %v1086
    %1106 = vmatprep.subr.bf16.mxu0 0
    %1107 = vmatpush1.bf16.msra.mxu0 %v1087
    %1108 = vmatprep.subr.bf16.mxu0 0
    %1109 = vmatpush1.bf16.msra.mxu0 %v1088
    %1110 = vmatprep.subr.bf16.mxu0 0
    %1111 = vmatpush1.bf16.msra.mxu0 %v1089
    %1112 = vmatprep.subr.bf16.mxu0 0
    %1113 = vmatpush1.bf16.msra.mxu0 %v1090
    %1114 = vmatprep.subr.bf16.mxu0 0
    %1115 = vmatpush1.bf16.msra.mxu0 %v1091
    %1116 = vmatprep.subr.bf16.mxu0 0
    %1117 = vmatpush1.bf16.msra.mxu0 0
    %1118 = vmatprep.subr.bf16.mxu0 0
    %1119 = vmatpush1.bf16.msra.mxu0 0
    %1120 = vmatprep.subr.bf16.mxu0 0
    %1121 = vmatpush1.bf16.msra.mxu0 0
    %1122 = vmatprep.subr.bf16.mxu0 0
    %1123 = vmatpush1.bf16.msra.mxu0 0
    %1124 = vmatprep.subr.bf16.mxu0 0
    %1125 = vmatpush1.bf16.msra.mxu0 0
    %1126 = vmatprep.subr.bf16.mxu0 0
    %1127 = vmatpush1.bf16.msra.mxu0 0
    %1128 = vmatprep.subr.bf16.mxu0 0
    %1129 = vmatpush1.bf16.msra.mxu0 0
    %1130 = vmatprep.subr.bf16.mxu0 0
    %1131 = vmatpush1.bf16.msra.mxu0 0
    %1132 = vmatprep.mubr.bf16.mxu0 0
    %1133 = vmatmul.mubr.bf16.gmra.mrb[0].mxu0 %v751
    %v1134 = vpop.f32.mrb[0].mxu0
    %v1135 = vadd.f32 %v1046, %v1134
    %v1136 = vpop.f32.mrb[0].mxu0
    %v1137 = vpop.f32.mrb[0].mxu0
    %v1138 = vadd.f32 %v1049, %v1137
    %v1139 = vpop.f32.mrb[0].mxu0
    %1140 = vdwg.mxu0
    %v1141 = vld [vmem:[%s7 + $0x8] sm:$0xf]
    %v1142 = vld [vmem:[%s7 + $0x24] sm:$0xf]
    %v1143 = vld [vmem:[%s7 + $0x40] sm:$0xf]
    %v1144 = vld [vmem:[%s7 + $0x5c] sm:$0xf]
    %v1145 = vld [vmem:[%s7 + $0x78] sm:$0xf]
    %v1146 = vld [vmem:[%s7 + $0x94] sm:$0xf]
    %v1147 = vld [vmem:[%s7 + $0xb0] sm:$0xf]
    %v1148 = vld [vmem:[%s7 + $0xcc] sm:$0xf]
    %v1149 = vld [vmem:[%s7 + $0xe8] sm:$0xf]
    %v1150 = vld [vmem:[%s7 + $0x104] sm:$0xf]
    %v1151 = vld [vmem:[%s7 + $0x120] sm:$0xf]
    %v1152 = vld [vmem:[%s7 + $0x13c] sm:$0xf]
    %v1153 = vld [vmem:[%s7 + $0x158] sm:$0xf]
    %v1154 = vld [vmem:[%s7 + $0x174] sm:$0xf]
    %v1155 = vld [vmem:[%s7 + $0x190] sm:$0xf]
    %v1156 = vld [vmem:[%s7 + $0x1ac] sm:$0xf]
    %v1157 = vld [vmem:[%s7 + $0x1c8] sm:$0xf]
    %v1158 = vld [vmem:[%s7 + $0x1e4] sm:$0xf]
    %v1159 = vld [vmem:[%s7 + $0x200] sm:$0xf]
    %v1160 = vld [vmem:[%s7 + $0x21c] sm:$0xf]
    %v1161 = vld [vmem:[%s7 + $0x238] sm:$0xf]
    %v1162 = vld [vmem:[%s7 + $0x254] sm:$0xf]
    %v1163 = vld [vmem:[%s7 + $0x270] sm:$0xf]
    %v1164 = vld [vmem:[%s7 + $0x28c] sm:$0xf]
    %v1165 = vld [vmem:[%s7 + $0x2a8] sm:$0xf]
    %v1166 = vld [vmem:[%s7 + $0x2c4] sm:$0xf]
    %v1167 = vld [vmem:[%s7 + $0x2e0] sm:$0xf]
    %v1168 = vld [vmem:[%s7 + $0x2fc] sm:$0xf]
    %v1169 = vld [vmem:[%s7 + $0x318] sm:$0xf]
    %v1170 = vld [vmem:[%s7 + $0x334] sm:$0xf]
    %v1171 = vld [vmem:[%s7 + $0x350] sm:$0xf]
    %v1172 = vld [vmem:[%s7 + $0x36c] sm:$0xf]
    %v1173 = vld [vmem:[%s8 + $0x2] sm:$0x1]
    %v1175 = vlaneseq
    %v1176 = vshrl.u32 %v1175, 7
    %v1177 = vsub.s32 0, %v1176
    %v1178 = vrot.slane %v1173, %v1177
    %v1212 = vunpack.c.l.b16 %v1141
    %v1213 = vunpack.c.l.b16 %v1142
    %v1214 = vunpack.c.l.b16 %v1143
    %v1215 = vunpack.c.l.b16 %v1144
    %v1216 = vunpack.c.l.b16 %v1145
    %v1217 = vunpack.c.l.b16 %v1146
    %v1218 = vunpack.c.l.b16 %v1147
    %v1219 = vunpack.c.l.b16 %v1148
    %v1220 = vunpack.c.l.b16 %v1149
    %v1221 = vunpack.c.l.b16 %v1150
    %v1222 = vunpack.c.l.b16 %v1151
    %v1223 = vunpack.c.l.b16 %v1152
    %v1224 = vunpack.c.l.b16 %v1153
    %v1225 = vunpack.c.l.b16 %v1154
    %v1226 = vunpack.c.l.b16 %v1155
    %v1227 = vunpack.c.l.b16 %v1156
    %v1228 = vunpack.c.l.b16 %v1157
    %v1229 = vunpack.c.l.b16 %v1158
    %v1230 = vunpack.c.l.b16 %v1159
    %v1231 = vunpack.c.l.b16 %v1160
    %v1232 = vunpack.c.l.b16 %v1161
    %v1233 = vunpack.c.l.b16 %v1162
    %v1234 = vunpack.c.l.b16 %v1163
    %v1235 = vunpack.c.l.b16 %v1164
    %v1236 = vunpack.c.l.b16 %v1165
    %v1237 = vunpack.c.l.b16 %v1166
    %v1238 = vunpack.c.l.b16 %v1167
    %v1239 = vunpack.c.l.b16 %v1168
    %v1240 = vunpack.c.l.b16 %v1169
    %v1241 = vunpack.c.l.b16 %v1170
    %v1242 = vunpack.c.l.b16 %v1171
    %v1243 = vunpack.c.l.b16 %v1172
    %v1244 = vpack.c.b16 %v1213, %v1212
    %v1245 = vpack.c.b16 %v1215, %v1214
    %v1246 = vpack.c.b16 %v1217, %v1216
    %v1247 = vpack.c.b16 %v1219, %v1218
    %v1248 = vpack.c.b16 %v1221, %v1220
    %v1249 = vpack.c.b16 %v1223, %v1222
    %v1250 = vpack.c.b16 %v1225, %v1224
    %v1251 = vpack.c.b16 %v1227, %v1226
    %v1252 = vpack.c.b16 %v1229, %v1228
    %v1253 = vpack.c.b16 %v1231, %v1230
    %v1254 = vpack.c.b16 %v1233, %v1232
    %v1255 = vpack.c.b16 %v1235, %v1234
    %v1256 = vpack.c.b16 %v1237, %v1236
    %v1257 = vpack.c.b16 %v1239, %v1238
    %v1258 = vpack.c.b16 %v1241, %v1240
    %v1259 = vpack.c.b16 %v1243, %v1242
    %1276 = vmatprep.subr.bf16.mxu0 0
    %1277 = vmatpush1.bf16.msra.mxu0 %v1244
    %1278 = vmatprep.subr.bf16.mxu0 0
    %1279 = vmatpush1.bf16.msra.mxu0 %v1245
    %1280 = vmatprep.subr.bf16.mxu0 0
    %1281 = vmatpush1.bf16.msra.mxu0 %v1246
    %1282 = vmatprep.subr.bf16.mxu0 0
    %1283 = vmatpush1.bf16.msra.mxu0 %v1247
    %1284 = vmatprep.subr.bf16.mxu0 0
    %1285 = vmatpush1.bf16.msra.mxu0 %v1248
    %1286 = vmatprep.subr.bf16.mxu0 0
    %1287 = vmatpush1.bf16.msra.mxu0 %v1249
    %1288 = vmatprep.subr.bf16.mxu0 0
    %1289 = vmatpush1.bf16.msra.mxu0 %v1250
    %1290 = vmatprep.subr.bf16.mxu0 0
    %1291 = vmatpush1.bf16.msra.mxu0 %v1251
    %1292 = vmatprep.subr.bf16.mxu0 0
    %1293 = vmatpush1.bf16.msra.mxu0 %v1252
    %1294 = vmatprep.subr.bf16.mxu0 0
    %1295 = vmatpush1.bf16.msra.mxu0 %v1253
    %1296 = vmatprep.subr.bf16.mxu0 0
    %1297 = vmatpush1.bf16.msra.mxu0 %v1254
    %1298 = vmatprep.subr.bf16.mxu0 0
    %1299 = vmatpush1.bf16.msra.mxu0 %v1255
    %1300 = vmatprep.subr.bf16.mxu0 0
    %1301 = vmatpush1.bf16.msra.mxu0 %v1256
    %1302 = vmatprep.subr.bf16.mxu0 0
    %1303 = vmatpush1.bf16.msra.mxu0 %v1257
    %1304 = vmatprep.subr.bf16.mxu0 0
    %1305 = vmatpush1.bf16.msra.mxu0 %v1258
    %1306 = vmatprep.subr.bf16.mxu0 0
    %1307 = vmatpush1.bf16.msra.mxu0 %v1259
    %1308 = vmatprep.mubr.bf16.mxu0 %v572
    %1309 = vmatmul.mubr.bf16.gmra.mrb[0].mxu0 %v571
    %v1310 = vpop.f32.mrb[0].mxu0
    %v1311 = vadd.f32 %v1178, %v1310
    %v1312 = vpop.f32.mrb[0].mxu0
    %v1313 = vpop.f32.mrb[0].mxu0
    %v1314 = vadd.f32 %v1178, %v1313
    %v1315 = vpop.f32.mrb[0].mxu0
    %1316 = vdwg.mxu0
    %v1317 = vmax.f32 %v1311, 0.0
    %v1318 = vmax.f32 %v1314, 0.0
    %v1319 = vpack.c.bf16 %v1318, %v1317
    %v1320 = vld [vmem:[%s9 + $0x80] sm:$0xf]
    %v1321 = vld [vmem:[%s9 + $0x84] sm:$0xf]
    %v1322 = vld [vmem:[%s9 + $0x88] sm:$0xf]
    %v1323 = vld [vmem:[%s9 + $0x8c] sm:$0xf]
    %v1324 = vld [vmem:[%s9 + $0x90] sm:$0xf]
    %v1325 = vld [vmem:[%s9 + $0x94] sm:$0xf]
    %v1326 = vld [vmem:[%s9 + $0x98] sm:$0xf]
    %v1327 = vld [vmem:[%s9 + $0x9c] sm:$0xf]
    %v1328 = vld [vmem:[%s9 + $0xa0] sm:$0xf]
    %v1329 = vld [vmem:[%s9 + $0xa4] sm:$0xf]
    %v1330 = vld [vmem:[%s9 + $0xa8] sm:$0xf]
    %v1331 = vld [vmem:[%s9 + $0xac] sm:$0xf]
    %v1332 = vld [vmem:[%s9 + $0xb0] sm:$0xf]
    %v1333 = vld [vmem:[%s9 + $0xb4] sm:$0xf]
    %v1334 = vld [vmem:[%s9 + $0xb8] sm:$0xf]
    %v1335 = vld [vmem:[%s9 + $0xbc] sm:$0xf]
    %v1352 = vunpack.c.l.b16 %v1320
    %v1353 = vunpack.c.l.b16 %v1321
    %v1354 = vunpack.c.l.b16 %v1322
    %v1355 = vunpack.c.l.b16 %v1323
    %v1356 = vunpack.c.l.b16 %v1324
    %v1357 = vunpack.c.l.b16 %v1325
    %v1358 = vunpack.c.l.b16 %v1326
    %v1359 = vunpack.c.l.b16 %v1327
    %v1360 = vunpack.c.l.b16 %v1328
    %v1361 = vunpack.c.l.b16 %v1329
    %v1362 = vunpack.c.l.b16 %v1330
    %v1363 = vunpack.c.l.b16 %v1331
    %v1364 = vunpack.c.l.b16 %v1332
    %v1365 = vunpack.c.l.b16 %v1333
    %v1366 = vunpack.c.l.b16 %v1334
    %v1367 = vunpack.c.l.b16 %v1335
    %v1368 = vpack.c.b16 %v1353, %v1352
    %v1369 = vpack.c.b16 %v1355, %v1354
    %v1370 = vpack.c.b16 %v1357, %v1356
    %v1371 = vpack.c.b16 %v1359, %v1358
    %v1372 = vpack.c.b16 %v1361, %v1360
    %v1373 = vpack.c.b16 %v1363, %v1362
    %v1374 = vpack.c.b16 %v1365, %v1364
    %v1375 = vpack.c.b16 %v1367, %v1366
    %1384 = vmatprep.subr.bf16.mxu0 0
    %1385 = vmatpush1.bf16.msra.mxu0 %v1368
    %1386 = vmatprep.subr.bf16.mxu0 0
    %1387 = vmatpush1.bf16.msra.mxu0 %v1369
    %1388 = vmatprep.subr.bf16.mxu0 0
    %1389 = vmatpush1.bf16.msra.mxu0 %v1370
    %1390 = vmatprep.subr.bf16.mxu0 0
    %1391 = vmatpush1.bf16.msra.mxu0 %v1371
    %1392 = vmatprep.subr.bf16.mxu0 0
    %1393 = vmatpush1.bf16.msra.mxu0 %v1372
    %1394 = vmatprep.subr.bf16.mxu0 0
    %1395 = vmatpush1.bf16.msra.mxu0 %v1373
    %1396 = vmatprep.subr.bf16.mxu0 0
    %1397 = vmatpush1.bf16.msra.mxu0 %v1374
    %1398 = vmatprep.subr.bf16.mxu0 0
    %1399 = vmatpush1.bf16.msra.mxu0 %v1375
    %1400 = vmatprep.subr.bf16.mxu0 0
    %1401 = vmatpush1.bf16.msra.mxu0 0
    %1402 = vmatprep.subr.bf16.mxu0 0
    %1403 = vmatpush1.bf16.msra.mxu0 0
    %1404 = vmatprep.subr.bf16.mxu0 0
    %1405 = vmatpush1.bf16.msra.mxu0 0
    %1406 = vmatprep.subr.bf16.mxu0 0
    %1407 = vmatpush1.bf16.msra.mxu0 0
    %1408 = vmatprep.subr.bf16.mxu0 0
    %1409 = vmatpush1.bf16.msra.mxu0 0
    %1410 = vmatprep.subr.bf16.mxu0 0
    %1411 = vmatpush1.bf16.msra.mxu0 0
    %1412 = vmatprep.subr.bf16.mxu0 0
    %1413 = vmatpush1.bf16.msra.mxu0 0
    %1414 = vmatprep.subr.bf16.mxu0 0
    %1415 = vmatpush1.bf16.msra.mxu0 0
    %1416 = vmatprep.mubr.bf16.mxu0 0
    %1417 = vmatmul.mubr.bf16.gmra.mrb[0].mxu0 %v1319
    %v1418 = vpop.f32.mrb[0].mxu0
    %v1419 = vadd.f32 0.0, %v1418
    %v1420 = vpop.f32.mrb[0].mxu0
    %v1421 = vpop.f32.mrb[0].mxu0
    %v1422 = vadd.f32 0.0, %v1421
    %v1423 = vpop.f32.mrb[0].mxu0
    %1424 = vdwg.mxu0
    %v1425 = vadd.f32 %v1135, %v1419
    %v1426 = vadd.f32 %v1138, %v1422
    %v1427 = vld [vmem:[%s7 + $0xc] sm:$0xf]
    %v1428 = vld [vmem:[%s7 + $0x28] sm:$0xf]
    %v1429 = vld [vmem:[%s7 + $0x44] sm:$0xf]
    %v1430 = vld [vmem:[%s7 + $0x60] sm:$0xf]
    %v1431 = vld [vmem:[%s7 + $0x7c] sm:$0xf]
    %v1432 = vld [vmem:[%s7 + $0x98] sm:$0xf]
    %v1433 = vld [vmem:[%s7 + $0xb4] sm:$0xf]
    %v1434 = vld [vmem:[%s7 + $0xd0] sm:$0xf]
    %v1435 = vld [vmem:[%s7 + $0xec] sm:$0xf]
    %v1436 = vld [vmem:[%s7 + $0x108] sm:$0xf]
    %v1437 = vld [vmem:[%s7 + $0x124] sm:$0xf]
    %v1438 = vld [vmem:[%s7 + $0x140] sm:$0xf]
    %v1439 = vld [vmem:[%s7 + $0x15c] sm:$0xf]
    %v1440 = vld [vmem:[%s7 + $0x178] sm:$0xf]
    %v1441 = vld [vmem:[%s7 + $0x194] sm:$0xf]
    %v1442 = vld [vmem:[%s7 + $0x1b0] sm:$0xf]
    %v1443 = vld [vmem:[%s7 + $0x1cc] sm:$0xf]
    %v1444 = vld [vmem:[%s7 + $0x1e8] sm:$0xf]
    %v1445 = vld [vmem:[%s7 + $0x204] sm:$0xf]
    %v1446 = vld [vmem:[%s7 + $0x220] sm:$0xf]
    %v1447 = vld [vmem:[%s7 + $0x23c] sm:$0xf]
    %v1448 = vld [vmem:[%s7 + $0x258] sm:$0xf]
    %v1449 = vld [vmem:[%s7 + $0x274] sm:$0xf]
    %v1450 = vld [vmem:[%s7 + $0x290] sm:$0xf]
    %v1451 = vld [vmem:[%s7 + $0x2ac] sm:$0xf]
    %v1452 = vld [vmem:[%s7 + $0x2c8] sm:$0xf]
    %v1453 = vld [vmem:[%s7 + $0x2e4] sm:$0xf]
    %v1454 = vld [vmem:[%s7 + $0x300] sm:$0xf]
    %v1455 = vld [vmem:[%s7 + $0x31c] sm:$0xf]
    %v1456 = vld [vmem:[%s7 + $0x338] sm:$0xf]
    %v1457 = vld [vmem:[%s7 + $0x354] sm:$0xf]
    %v1458 = vld [vmem:[%s7 + $0x370] sm:$0xf]
    %v1459 = vld [vmem:[%s8 + $0x3] sm:$0x1]
    %v1461 = vlaneseq
    %v1462 = vshrl.u32 %v1461, 7
    %v1463 = vsub.s32 0, %v1462
    %v1464 = vrot.slane %v1459, %v1463
    %v1498 = vunpack.c.l.b16 %v1427
    %v1499 = vunpack.c.l.b16 %v1428
    %v1500 = vunpack.c.l.b16 %v1429
    %v1501 = vunpack.c.l.b16 %v1430
    %v1502 = vunpack.c.l.b16 %v1431
    %v1503 = vunpack.c.l.b16 %v1432
    %v1504 = vunpack.c.l.b16 %v1433
    %v1505 = vunpack.c.l.b16 %v1434
    %v1506 = vunpack.c.l.b16 %v1435
    %v1507 = vunpack.c.l.b16 %v1436
    %v1508 = vunpack.c.l.b16 %v1437
    %v1509 = vunpack.c.l.b16 %v1438
    %v1510 = vunpack.c.l.b16 %v1439
    %v1511 = vunpack.c.l.b16 %v1440
    %v1512 = vunpack.c.l.b16 %v1441
    %v1513 = vunpack.c.l.b16 %v1442
    %v1514 = vunpack.c.l.b16 %v1443
    %v1515 = vunpack.c.l.b16 %v1444
    %v1516 = vunpack.c.l.b16 %v1445
    %v1517 = vunpack.c.l.b16 %v1446
    %v1518 = vunpack.c.l.b16 %v1447
    %v1519 = vunpack.c.l.b16 %v1448
    %v1520 = vunpack.c.l.b16 %v1449
    %v1521 = vunpack.c.l.b16 %v1450
    %v1522 = vunpack.c.l.b16 %v1451
    %v1523 = vunpack.c.l.b16 %v1452
    %v1524 = vunpack.c.l.b16 %v1453
    %v1525 = vunpack.c.l.b16 %v1454
    %v1526 = vunpack.c.l.b16 %v1455
    %v1527 = vunpack.c.l.b16 %v1456
    %v1528 = vunpack.c.l.b16 %v1457
    %v1529 = vunpack.c.l.b16 %v1458
    %v1530 = vpack.c.b16 %v1499, %v1498
    %v1531 = vpack.c.b16 %v1501, %v1500
    %v1532 = vpack.c.b16 %v1503, %v1502
    %v1533 = vpack.c.b16 %v1505, %v1504
    %v1534 = vpack.c.b16 %v1507, %v1506
    %v1535 = vpack.c.b16 %v1509, %v1508
    %v1536 = vpack.c.b16 %v1511, %v1510
    %v1537 = vpack.c.b16 %v1513, %v1512
    %v1538 = vpack.c.b16 %v1515, %v1514
    %v1539 = vpack.c.b16 %v1517, %v1516
    %v1540 = vpack.c.b16 %v1519, %v1518
    %v1541 = vpack.c.b16 %v1521, %v1520
    %v1542 = vpack.c.b16 %v1523, %v1522
    %v1543 = vpack.c.b16 %v1525, %v1524
    %v1544 = vpack.c.b16 %v1527, %v1526
    %v1545 = vpack.c.b16 %v1529, %v1528
    %1562 = vmatprep.subr.bf16.mxu0 0
    %1563 = vmatpush1.bf16.msra.mxu0 %v1530
    %1564 = vmatprep.subr.bf16.mxu0 0
    %1565 = vmatpush1.bf16.msra.mxu0 %v1531
    %1566 = vmatprep.subr.bf16.mxu0 0
    %1567 = vmatpush1.bf16.msra.mxu0 %v1532
    %1568 = vmatprep.subr.bf16.mxu0 0
    %1569 = vmatpush1.bf16.msra.mxu0 %v1533
    %1570 = vmatprep.subr.bf16.mxu0 0
    %1571 = vmatpush1.bf16.msra.mxu0 %v1534
    %1572 = vmatprep.subr.bf16.mxu0 0
    %1573 = vmatpush1.bf16.msra.mxu0 %v1535
    %1574 = vmatprep.subr.bf16.mxu0 0
    %1575 = vmatpush1.bf16.msra.mxu0 %v1536
    %1576 = vmatprep.subr.bf16.mxu0 0
    %1577 = vmatpush1.bf16.msra.mxu0 %v1537
    %1578 = vmatprep.subr.bf16.mxu0 0
    %1579 = vmatpush1.bf16.msra.mxu0 %v1538
    %1580 = vmatprep.subr.bf16.mxu0 0
    %1581 = vmatpush1.bf16.msra.mxu0 %v1539
    %1582 = vmatprep.subr.bf16.mxu0 0
    %1583 = vmatpush1.bf16.msra.mxu0 %v1540
    %1584 = vmatprep.subr.bf16.mxu0 0
    %1585 = vmatpush1.bf16.msra.mxu0 %v1541
    %1586 = vmatprep.subr.bf16.mxu0 0
    %1587 = vmatpush1.bf16.msra.mxu0 %v1542
    %1588 = vmatprep.subr.bf16.mxu0 0
    %1589 = vmatpush1.bf16.msra.mxu0 %v1543
    %1590 = vmatprep.subr.bf16.mxu0 0
    %1591 = vmatpush1.bf16.msra.mxu0 %v1544
    %1592 = vmatprep.subr.bf16.mxu0 0
    %1593 = vmatpush1.bf16.msra.mxu0 %v1545
    %1594 = vmatprep.mubr.bf16.mxu0 %v572
    %1595 = vmatmul.mubr.bf16.gmra.mrb[0].mxu0 %v571
    %v1596 = vpop.f32.mrb[0].mxu0
    %v1597 = vadd.f32 %v1464, %v1596
    %v1598 = vpop.f32.mrb[0].mxu0
    %v1599 = vpop.f32.mrb[0].mxu0
    %v1600 = vadd.f32 %v1464, %v1599
    %v1601 = vpop.f32.mrb[0].mxu0
    %1602 = vdwg.mxu0
    %v1603 = vmax.f32 %v1597, 0.0
    %v1604 = vmax.f32 %v1600, 0.0
    %v1605 = vpack.c.bf16 %v1604, %v1603
    %v1606 = vld [vmem:[%s9 + $0xc0] sm:$0xf]
    %v1607 = vld [vmem:[%s9 + $0xc4] sm:$0xf]
    %v1608 = vld [vmem:[%s9 + $0xc8] sm:$0xf]
    %v1609 = vld [vmem:[%s9 + $0xcc] sm:$0xf]
    %v1610 = vld [vmem:[%s9 + $0xd0] sm:$0xf]
    %v1611 = vld [vmem:[%s9 + $0xd4] sm:$0xf]
    %v1612 = vld [vmem:[%s9 + $0xd8] sm:$0xf]
    %v1613 = vld [vmem:[%s9 + $0xdc] sm:$0xf]
    %v1614 = vld [vmem:[%s9 + $0xe0] sm:$0xf]
    %v1615 = vld [vmem:[%s9 + $0xe4] sm:$0xf]
    %v1616 = vld [vmem:[%s9 + $0xe8] sm:$0xf]
    %v1617 = vld [vmem:[%s9 + $0xec] sm:$0xf]
    %v1618 = vld [vmem:[%s9 + $0xf0] sm:$0xf]
    %v1619 = vld [vmem:[%s9 + $0xf4] sm:$0xf]
    %v1620 = vld [vmem:[%s9 + $0xf8] sm:$0xf]
    %v1621 = vld [vmem:[%s9 + $0xfc] sm:$0xf]
    %v1638 = vunpack.c.l.b16 %v1606
    %v1639 = vunpack.c.l.b16 %v1607
    %v1640 = vunpack.c.l.b16 %v1608
    %v1641 = vunpack.c.l.b16 %v1609
    %v1642 = vunpack.c.l.b16 %v1610
    %v1643 = vunpack.c.l.b16 %v1611
    %v1644 = vunpack.c.l.b16 %v1612
    %v1645 = vunpack.c.l.b16 %v1613
    %v1646 = vunpack.c.l.b16 %v1614
    %v1647 = vunpack.c.l.b16 %v1615
    %v1648 = vunpack.c.l.b16 %v1616
    %v1649 = vunpack.c.l.b16 %v1617
    %v1650 = vunpack.c.l.b16 %v1618
    %v1651 = vunpack.c.l.b16 %v1619
    %v1652 = vunpack.c.l.b16 %v1620
    %v1653 = vunpack.c.l.b16 %v1621
    %v1654 = vpack.c.b16 %v1639, %v1638
    %v1655 = vpack.c.b16 %v1641, %v1640
    %v1656 = vpack.c.b16 %v1643, %v1642
    %v1657 = vpack.c.b16 %v1645, %v1644
    %v1658 = vpack.c.b16 %v1647, %v1646
    %v1659 = vpack.c.b16 %v1649, %v1648
    %v1660 = vpack.c.b16 %v1651, %v1650
    %v1661 = vpack.c.b16 %v1653, %v1652
    %1670 = vmatprep.subr.bf16.mxu0 0
    %1671 = vmatpush1.bf16.msra.mxu0 %v1654
    %1672 = vmatprep.subr.bf16.mxu0 0
    %1673 = vmatpush1.bf16.msra.mxu0 %v1655
    %1674 = vmatprep.subr.bf16.mxu0 0
    %1675 = vmatpush1.bf16.msra.mxu0 %v1656
    %1676 = vmatprep.subr.bf16.mxu0 0
    %1677 = vmatpush1.bf16.msra.mxu0 %v1657
    %1678 = vmatprep.subr.bf16.mxu0 0
    %1679 = vmatpush1.bf16.msra.mxu0 %v1658
    %1680 = vmatprep.subr.bf16.mxu0 0
    %1681 = vmatpush1.bf16.msra.mxu0 %v1659
    %1682 = vmatprep.subr.bf16.mxu0 0
    %1683 = vmatpush1.bf16.msra.mxu0 %v1660
    %1684 = vmatprep.subr.bf16.mxu0 0
    %1685 = vmatpush1.bf16.msra.mxu0 %v1661
    %1686 = vmatprep.subr.bf16.mxu0 0
    %1687 = vmatpush1.bf16.msra.mxu0 0
    %1688 = vmatprep.subr.bf16.mxu0 0
    %1689 = vmatpush1.bf16.msra.mxu0 0
    %1690 = vmatprep.subr.bf16.mxu0 0
    %1691 = vmatpush1.bf16.msra.mxu0 0
    %1692 = vmatprep.subr.bf16.mxu0 0
    %1693 = vmatpush1.bf16.msra.mxu0 0
    %1694 = vmatprep.subr.bf16.mxu0 0
    %1695 = vmatpush1.bf16.msra.mxu0 0
    %1696 = vmatprep.subr.bf16.mxu0 0
    %1697 = vmatpush1.bf16.msra.mxu0 0
    %1698 = vmatprep.subr.bf16.mxu0 0
    %1699 = vmatpush1.bf16.msra.mxu0 0
    %1700 = vmatprep.subr.bf16.mxu0 0
    %1701 = vmatpush1.bf16.msra.mxu0 0
    %1702 = vmatprep.mubr.bf16.mxu0 0
    %1703 = vmatmul.mubr.bf16.gmra.mrb[0].mxu0 %v1605
    %v1704 = vpop.f32.mrb[0].mxu0
    %v1705 = vadd.f32 0.0, %v1704
    %v1706 = vpop.f32.mrb[0].mxu0
    %v1707 = vpop.f32.mrb[0].mxu0
    %v1708 = vadd.f32 0.0, %v1707
    %v1709 = vpop.f32.mrb[0].mxu0
    %1710 = vdwg.mxu0
    %v1711 = vadd.f32 %v1425, %v1705
    %v1712 = vadd.f32 %v1426, %v1708
    %v1713 = vld [vmem:[%s7 + $0x10] sm:$0xf]
    %v1714 = vld [vmem:[%s7 + $0x2c] sm:$0xf]
    %v1715 = vld [vmem:[%s7 + $0x48] sm:$0xf]
    %v1716 = vld [vmem:[%s7 + $0x64] sm:$0xf]
    %v1717 = vld [vmem:[%s7 + $0x80] sm:$0xf]
    %v1718 = vld [vmem:[%s7 + $0x9c] sm:$0xf]
    %v1719 = vld [vmem:[%s7 + $0xb8] sm:$0xf]
    %v1720 = vld [vmem:[%s7 + $0xd4] sm:$0xf]
    %v1721 = vld [vmem:[%s7 + $0xf0] sm:$0xf]
    %v1722 = vld [vmem:[%s7 + $0x10c] sm:$0xf]
    %v1723 = vld [vmem:[%s7 + $0x128] sm:$0xf]
    %v1724 = vld [vmem:[%s7 + $0x144] sm:$0xf]
    %v1725 = vld [vmem:[%s7 + $0x160] sm:$0xf]
    %v1726 = vld [vmem:[%s7 + $0x17c] sm:$0xf]
    %v1727 = vld [vmem:[%s7 + $0x198] sm:$0xf]
    %v1728 = vld [vmem:[%s7 + $0x1b4] sm:$0xf]
    %v1729 = vld [vmem:[%s7 + $0x1d0] sm:$0xf]
    %v1730 = vld [vmem:[%s7 + $0x1ec] sm:$0xf]
    %v1731 = vld [vmem:[%s7 + $0x208] sm:$0xf]
    %v1732 = vld [vmem:[%s7 + $0x224] sm:$0xf]
    %v1733 = vld [vmem:[%s7 + $0x240] sm:$0xf]
    %v1734 = vld [vmem:[%s7 + $0x25c] sm:$0xf]
    %v1735 = vld [vmem:[%s7 + $0x278] sm:$0xf]
    %v1736 = vld [vmem:[%s7 + $0x294] sm:$0xf]
    %v1737 = vld [vmem:[%s7 + $0x2b0] sm:$0xf]
    %v1738 = vld [vmem:[%s7 + $0x2cc] sm:$0xf]
    %v1739 = vld [vmem:[%s7 + $0x2e8] sm:$0xf]
    %v1740 = vld [vmem:[%s7 + $0x304] sm:$0xf]
    %v1741 = vld [vmem:[%s7 + $0x320] sm:$0xf]
    %v1742 = vld [vmem:[%s7 + $0x33c] sm:$0xf]
    %v1743 = vld [vmem:[%s7 + $0x358] sm:$0xf]
    %v1744 = vld [vmem:[%s7 + $0x374] sm:$0xf]
    %v1745 = vld [vmem:[%s8 + $0x4] sm:$0x1]
    %v1747 = vlaneseq
    %v1748 = vshrl.u32 %v1747, 7
    %v1749 = vsub.s32 0, %v1748
    %v1750 = vrot.slane %v1745, %v1749
    %v1784 = vunpack.c.l.b16 %v1713
    %v1785 = vunpack.c.l.b16 %v1714
    %v1786 = vunpack.c.l.b16 %v1715
    %v1787 = vunpack.c.l.b16 %v1716
    %v1788 = vunpack.c.l.b16 %v1717
    %v1789 = vunpack.c.l.b16 %v1718
    %v1790 = vunpack.c.l.b16 %v1719
    %v1791 = vunpack.c.l.b16 %v1720
    %v1792 = vunpack.c.l.b16 %v1721
    %v1793 = vunpack.c.l.b16 %v1722
    %v1794 = vunpack.c.l.b16 %v1723
    %v1795 = vunpack.c.l.b16 %v1724
    %v1796 = vunpack.c.l.b16 %v1725
    %v1797 = vunpack.c.l.b16 %v1726
    %v1798 = vunpack.c.l.b16 %v1727
    %v1799 = vunpack.c.l.b16 %v1728
    %v1800 = vunpack.c.l.b16 %v1729
    %v1801 = vunpack.c.l.b16 %v1730
    %v1802 = vunpack.c.l.b16 %v1731
    %v1803 = vunpack.c.l.b16 %v1732
    %v1804 = vunpack.c.l.b16 %v1733
    %v1805 = vunpack.c.l.b16 %v1734
    %v1806 = vunpack.c.l.b16 %v1735
    %v1807 = vunpack.c.l.b16 %v1736
    %v1808 = vunpack.c.l.b16 %v1737
    %v1809 = vunpack.c.l.b16 %v1738
    %v1810 = vunpack.c.l.b16 %v1739
    %v1811 = vunpack.c.l.b16 %v1740
    %v1812 = vunpack.c.l.b16 %v1741
    %v1813 = vunpack.c.l.b16 %v1742
    %v1814 = vunpack.c.l.b16 %v1743
    %v1815 = vunpack.c.l.b16 %v1744
    %v1816 = vpack.c.b16 %v1785, %v1784
    %v1817 = vpack.c.b16 %v1787, %v1786
    %v1818 = vpack.c.b16 %v1789, %v1788
    %v1819 = vpack.c.b16 %v1791, %v1790
    %v1820 = vpack.c.b16 %v1793, %v1792
    %v1821 = vpack.c.b16 %v1795, %v1794
    %v1822 = vpack.c.b16 %v1797, %v1796
    %v1823 = vpack.c.b16 %v1799, %v1798
    %v1824 = vpack.c.b16 %v1801, %v1800
    %v1825 = vpack.c.b16 %v1803, %v1802
    %v1826 = vpack.c.b16 %v1805, %v1804
    %v1827 = vpack.c.b16 %v1807, %v1806
    %v1828 = vpack.c.b16 %v1809, %v1808
    %v1829 = vpack.c.b16 %v1811, %v1810
    %v1830 = vpack.c.b16 %v1813, %v1812
    %v1831 = vpack.c.b16 %v1815, %v1814
    %1848 = vmatprep.subr.bf16.mxu0 0
    %1849 = vmatpush1.bf16.msra.mxu0 %v1816
    %1850 = vmatprep.subr.bf16.mxu0 0
    %1851 = vmatpush1.bf16.msra.mxu0 %v1817
    %1852 = vmatprep.subr.bf16.mxu0 0
    %1853 = vmatpush1.bf16.msra.mxu0 %v1818
    %1854 = vmatprep.subr.bf16.mxu0 0
    %1855 = vmatpush1.bf16.msra.mxu0 %v1819
    %1856 = vmatprep.subr.bf16.mxu0 0
    %1857 = vmatpush1.bf16.msra.mxu0 %v1820
    %1858 = vmatprep.subr.bf16.mxu0 0
    %1859 = vmatpush1.bf16.msra.mxu0 %v1821
    %1860 = vmatprep.subr.bf16.mxu0 0
    %1861 = vmatpush1.bf16.msra.mxu0 %v1822
    %1862 = vmatprep.subr.bf16.mxu0 0
    %1863 = vmatpush1.bf16.msra.mxu0 %v1823
    %1864 = vmatprep.subr.bf16.mxu0 0
    %1865 = vmatpush1.bf16.msra.mxu0 %v1824
    %1866 = vmatprep.subr.bf16.mxu0 0
    %1867 = vmatpush1.bf16.msra.mxu0 %v1825
    %1868 = vmatprep.subr.bf16.mxu0 0
    %1869 = vmatpush1.bf16.msra.mxu0 %v1826
    %1870 = vmatprep.subr.bf16.mxu0 0
    %1871 = vmatpush1.bf16.msra.mxu0 %v1827
    %1872 = vmatprep.subr.bf16.mxu0 0
    %1873 = vmatpush1.bf16.msra.mxu0 %v1828
    %1874 = vmatprep.subr.bf16.mxu0 0
    %1875 = vmatpush1.bf16.msra.mxu0 %v1829
    %1876 = vmatprep.subr.bf16.mxu0 0
    %1877 = vmatpush1.bf16.msra.mxu0 %v1830
    %1878 = vmatprep.subr.bf16.mxu0 0
    %1879 = vmatpush1.bf16.msra.mxu0 %v1831
    %1880 = vmatprep.mubr.bf16.mxu0 %v572
    %1881 = vmatmul.mubr.bf16.gmra.mrb[0].mxu0 %v571
    %v1882 = vpop.f32.mrb[0].mxu0
    %v1883 = vadd.f32 %v1750, %v1882
    %v1884 = vpop.f32.mrb[0].mxu0
    %v1885 = vpop.f32.mrb[0].mxu0
    %v1886 = vadd.f32 %v1750, %v1885
    %v1887 = vpop.f32.mrb[0].mxu0
    %1888 = vdwg.mxu0
    %v1889 = vmax.f32 %v1883, 0.0
    %v1890 = vmax.f32 %v1886, 0.0
    %v1891 = vpack.c.bf16 %v1890, %v1889
    %v1892 = vld [vmem:[%s9 + $0x100] sm:$0xf]
    %v1893 = vld [vmem:[%s9 + $0x104] sm:$0xf]
    %v1894 = vld [vmem:[%s9 + $0x108] sm:$0xf]
    %v1895 = vld [vmem:[%s9 + $0x10c] sm:$0xf]
    %v1896 = vld [vmem:[%s9 + $0x110] sm:$0xf]
    %v1897 = vld [vmem:[%s9 + $0x114] sm:$0xf]
    %v1898 = vld [vmem:[%s9 + $0x118] sm:$0xf]
    %v1899 = vld [vmem:[%s9 + $0x11c] sm:$0xf]
    %v1900 = vld [vmem:[%s9 + $0x120] sm:$0xf]
    %v1901 = vld [vmem:[%s9 + $0x124] sm:$0xf]
    %v1902 = vld [vmem:[%s9 + $0x128] sm:$0xf]
    %v1903 = vld [vmem:[%s9 + $0x12c] sm:$0xf]
    %v1904 = vld [vmem:[%s9 + $0x130] sm:$0xf]
    %v1905 = vld [vmem:[%s9 + $0x134] sm:$0xf]
    %v1906 = vld [vmem:[%s9 + $0x138] sm:$0xf]
    %v1907 = vld [vmem:[%s9 + $0x13c] sm:$0xf]
    %v1924 = vunpack.c.l.b16 %v1892
    %v1925 = vunpack.c.l.b16 %v1893
    %v1926 = vunpack.c.l.b16 %v1894
    %v1927 = vunpack.c.l.b16 %v1895
    %v1928 = vunpack.c.l.b16 %v1896
    %v1929 = vunpack.c.l.b16 %v1897
    %v1930 = vunpack.c.l.b16 %v1898
    %v1931 = vunpack.c.l.b16 %v1899
    %v1932 = vunpack.c.l.b16 %v1900
    %v1933 = vunpack.c.l.b16 %v1901
    %v1934 = vunpack.c.l.b16 %v1902
    %v1935 = vunpack.c.l.b16 %v1903
    %v1936 = vunpack.c.l.b16 %v1904
    %v1937 = vunpack.c.l.b16 %v1905
    %v1938 = vunpack.c.l.b16 %v1906
    %v1939 = vunpack.c.l.b16 %v1907
    %v1940 = vpack.c.b16 %v1925, %v1924
    %v1941 = vpack.c.b16 %v1927, %v1926
    %v1942 = vpack.c.b16 %v1929, %v1928
    %v1943 = vpack.c.b16 %v1931, %v1930
    %v1944 = vpack.c.b16 %v1933, %v1932
    %v1945 = vpack.c.b16 %v1935, %v1934
    %v1946 = vpack.c.b16 %v1937, %v1936
    %v1947 = vpack.c.b16 %v1939, %v1938
    %1956 = vmatprep.subr.bf16.mxu0 0
    %1957 = vmatpush1.bf16.msra.mxu0 %v1940
    %1958 = vmatprep.subr.bf16.mxu0 0
    %1959 = vmatpush1.bf16.msra.mxu0 %v1941
    %1960 = vmatprep.subr.bf16.mxu0 0
    %1961 = vmatpush1.bf16.msra.mxu0 %v1942
    %1962 = vmatprep.subr.bf16.mxu0 0
    %1963 = vmatpush1.bf16.msra.mxu0 %v1943
    %1964 = vmatprep.subr.bf16.mxu0 0
    %1965 = vmatpush1.bf16.msra.mxu0 %v1944
    %1966 = vmatprep.subr.bf16.mxu0 0
    %1967 = vmatpush1.bf16.msra.mxu0 %v1945
    %1968 = vmatprep.subr.bf16.mxu0 0
    %1969 = vmatpush1.bf16.msra.mxu0 %v1946
    %1970 = vmatprep.subr.bf16.mxu0 0
    %1971 = vmatpush1.bf16.msra.mxu0 %v1947
    %1972 = vmatprep.subr.bf16.mxu0 0
    %1973 = vmatpush1.bf16.msra.mxu0 0
    %1974 = vmatprep.subr.bf16.mxu0 0
    %1975 = vmatpush1.bf16.msra.mxu0 0
    %1976 = vmatprep.subr.bf16.mxu0 0
    %1977 = vmatpush1.bf16.msra.mxu0 0
    %1978 = vmatprep.subr.bf16.mxu0 0
    %1979 = vmatpush1.bf16.msra.mxu0 0
    %1980 = vmatprep.subr.bf16.mxu0 0
    %1981 = vmatpush1.bf16.msra.mxu0 0
    %1982 = vmatprep.subr.bf16.mxu0 0
    %1983 = vmatpush1.bf16.msra.mxu0 0
    %1984 = vmatprep.subr.bf16.mxu0 0
    %1985 = vmatpush1.bf16.msra.mxu0 0
    %1986 = vmatprep.subr.bf16.mxu0 0
    %1987 = vmatpush1.bf16.msra.mxu0 0
    %1988 = vmatprep.mubr.bf16.mxu0 0
    %1989 = vmatmul.mubr.bf16.gmra.mrb[0].mxu0 %v1891
    %v1990 = vpop.f32.mrb[0].mxu0
    %v1991 = vadd.f32 0.0, %v1990
    %v1992 = vpop.f32.mrb[0].mxu0
    %v1993 = vpop.f32.mrb[0].mxu0
    %v1994 = vadd.f32 0.0, %v1993
    %v1995 = vpop.f32.mrb[0].mxu0
    %1996 = vdwg.mxu0
    %v1997 = vadd.f32 %v1711, %v1991
    %v1998 = vadd.f32 %v1712, %v1994
    %v1999 = vld [vmem:[%s7 + $0x14] sm:$0xf]
    %v2000 = vld [vmem:[%s7 + $0x30] sm:$0xf]
    %v2001 = vld [vmem:[%s7 + $0x4c] sm:$0xf]
    %v2002 = vld [vmem:[%s7 + $0x68] sm:$0xf]
    %v2003 = vld [vmem:[%s7 + $0x84] sm:$0xf]
    %v2004 = vld [vmem:[%s7 + $0xa0] sm:$0xf]
    %v2005 = vld [vmem:[%s7 + $0xbc] sm:$0xf]
    %v2006 = vld [vmem:[%s7 + $0xd8] sm:$0xf]
    %v2007 = vld [vmem:[%s7 + $0xf4] sm:$0xf]
    %v2008 = vld [vmem:[%s7 + $0x110] sm:$0xf]
    %v2009 = vld [vmem:[%s7 + $0x12c] sm:$0xf]
    %v2010 = vld [vmem:[%s7 + $0x148] sm:$0xf]
    %v2011 = vld [vmem:[%s7 + $0x164] sm:$0xf]
    %v2012 = vld [vmem:[%s7 + $0x180] sm:$0xf]
    %v2013 = vld [vmem:[%s7 + $0x19c] sm:$0xf]
    %v2014 = vld [vmem:[%s7 + $0x1b8] sm:$0xf]
    %v2015 = vld [vmem:[%s7 + $0x1d4] sm:$0xf]
    %v2016 = vld [vmem:[%s7 + $0x1f0] sm:$0xf]
    %v2017 = vld [vmem:[%s7 + $0x20c] sm:$0xf]
    %v2018 = vld [vmem:[%s7 + $0x228] sm:$0xf]
    %v2019 = vld [vmem:[%s7 + $0x244] sm:$0xf]
    %v2020 = vld [vmem:[%s7 + $0x260] sm:$0xf]
    %v2021 = vld [vmem:[%s7 + $0x27c] sm:$0xf]
    %v2022 = vld [vmem:[%s7 + $0x298] sm:$0xf]
    %v2023 = vld [vmem:[%s7 + $0x2b4] sm:$0xf]
    %v2024 = vld [vmem:[%s7 + $0x2d0] sm:$0xf]
    %v2025 = vld [vmem:[%s7 + $0x2ec] sm:$0xf]
    %v2026 = vld [vmem:[%s7 + $0x308] sm:$0xf]
    %v2027 = vld [vmem:[%s7 + $0x324] sm:$0xf]
    %v2028 = vld [vmem:[%s7 + $0x340] sm:$0xf]
    %v2029 = vld [vmem:[%s7 + $0x35c] sm:$0xf]
    %v2030 = vld [vmem:[%s7 + $0x378] sm:$0xf]
    %v2031 = vld [vmem:[%s8 + $0x5] sm:$0x1]
    %v2033 = vlaneseq
    %v2034 = vshrl.u32 %v2033, 7
    %v2035 = vsub.s32 0, %v2034
    %v2036 = vrot.slane %v2031, %v2035
    %v2070 = vunpack.c.l.b16 %v1999
    %v2071 = vunpack.c.l.b16 %v2000
    %v2072 = vunpack.c.l.b16 %v2001
    %v2073 = vunpack.c.l.b16 %v2002
    %v2074 = vunpack.c.l.b16 %v2003
    %v2075 = vunpack.c.l.b16 %v2004
    %v2076 = vunpack.c.l.b16 %v2005
    %v2077 = vunpack.c.l.b16 %v2006
    %v2078 = vunpack.c.l.b16 %v2007
    %v2079 = vunpack.c.l.b16 %v2008
    %v2080 = vunpack.c.l.b16 %v2009
    %v2081 = vunpack.c.l.b16 %v2010
    %v2082 = vunpack.c.l.b16 %v2011
    %v2083 = vunpack.c.l.b16 %v2012
    %v2084 = vunpack.c.l.b16 %v2013
    %v2085 = vunpack.c.l.b16 %v2014
    %v2086 = vunpack.c.l.b16 %v2015
    %v2087 = vunpack.c.l.b16 %v2016
    %v2088 = vunpack.c.l.b16 %v2017
    %v2089 = vunpack.c.l.b16 %v2018
    %v2090 = vunpack.c.l.b16 %v2019
    %v2091 = vunpack.c.l.b16 %v2020
    %v2092 = vunpack.c.l.b16 %v2021
    %v2093 = vunpack.c.l.b16 %v2022
    %v2094 = vunpack.c.l.b16 %v2023
    %v2095 = vunpack.c.l.b16 %v2024
    %v2096 = vunpack.c.l.b16 %v2025
    %v2097 = vunpack.c.l.b16 %v2026
    %v2098 = vunpack.c.l.b16 %v2027
    %v2099 = vunpack.c.l.b16 %v2028
    %v2100 = vunpack.c.l.b16 %v2029
    %v2101 = vunpack.c.l.b16 %v2030
    %v2102 = vpack.c.b16 %v2071, %v2070
    %v2103 = vpack.c.b16 %v2073, %v2072
    %v2104 = vpack.c.b16 %v2075, %v2074
    %v2105 = vpack.c.b16 %v2077, %v2076
    %v2106 = vpack.c.b16 %v2079, %v2078
    %v2107 = vpack.c.b16 %v2081, %v2080
    %v2108 = vpack.c.b16 %v2083, %v2082
    %v2109 = vpack.c.b16 %v2085, %v2084
    %v2110 = vpack.c.b16 %v2087, %v2086
    %v2111 = vpack.c.b16 %v2089, %v2088
    %v2112 = vpack.c.b16 %v2091, %v2090
    %v2113 = vpack.c.b16 %v2093, %v2092
    %v2114 = vpack.c.b16 %v2095, %v2094
    %v2115 = vpack.c.b16 %v2097, %v2096
    %v2116 = vpack.c.b16 %v2099, %v2098
    %v2117 = vpack.c.b16 %v2101, %v2100
    %2134 = vmatprep.subr.bf16.mxu0 0
    %2135 = vmatpush1.bf16.msra.mxu0 %v2102
    %2136 = vmatprep.subr.bf16.mxu0 0
    %2137 = vmatpush1.bf16.msra.mxu0 %v2103
    %2138 = vmatprep.subr.bf16.mxu0 0
    %2139 = vmatpush1.bf16.msra.mxu0 %v2104
    %2140 = vmatprep.subr.bf16.mxu0 0
    %2141 = vmatpush1.bf16.msra.mxu0 %v2105
    %2142 = vmatprep.subr.bf16.mxu0 0
    %2143 = vmatpush1.bf16.msra.mxu0 %v2106
    %2144 = vmatprep.subr.bf16.mxu0 0
    %2145 = vmatpush1.bf16.msra.mxu0 %v2107
    %2146 = vmatprep.subr.bf16.mxu0 0
    %2147 = vmatpush1.bf16.msra.mxu0 %v2108
    %2148 = vmatprep.subr.bf16.mxu0 0
    %2149 = vmatpush1.bf16.msra.mxu0 %v2109
    %2150 = vmatprep.subr.bf16.mxu0 0
    %2151 = vmatpush1.bf16.msra.mxu0 %v2110
    %2152 = vmatprep.subr.bf16.mxu0 0
    %2153 = vmatpush1.bf16.msra.mxu0 %v2111
    %2154 = vmatprep.subr.bf16.mxu0 0
    %2155 = vmatpush1.bf16.msra.mxu0 %v2112
    %2156 = vmatprep.subr.bf16.mxu0 0
    %2157 = vmatpush1.bf16.msra.mxu0 %v2113
    %2158 = vmatprep.subr.bf16.mxu0 0
    %2159 = vmatpush1.bf16.msra.mxu0 %v2114
    %2160 = vmatprep.subr.bf16.mxu0 0
    %2161 = vmatpush1.bf16.msra.mxu0 %v2115
    %2162 = vmatprep.subr.bf16.mxu0 0
    %2163 = vmatpush1.bf16.msra.mxu0 %v2116
    %2164 = vmatprep.subr.bf16.mxu0 0
    %2165 = vmatpush1.bf16.msra.mxu0 %v2117
    %2166 = vmatprep.mubr.bf16.mxu0 %v572
    %2167 = vmatmul.mubr.bf16.gmra.mrb[0].mxu0 %v571
    %v2168 = vpop.f32.mrb[0].mxu0
    %v2169 = vadd.f32 %v2036, %v2168
    %v2170 = vpop.f32.mrb[0].mxu0
    %v2171 = vpop.f32.mrb[0].mxu0
    %v2172 = vadd.f32 %v2036, %v2171
    %v2173 = vpop.f32.mrb[0].mxu0
    %2174 = vdwg.mxu0
    %v2175 = vmax.f32 %v2169, 0.0
    %v2176 = vmax.f32 %v2172, 0.0
    %v2177 = vpack.c.bf16 %v2176, %v2175
    %v2178 = vld [vmem:[%s9 + $0x140] sm:$0xf]
    %v2179 = vld [vmem:[%s9 + $0x144] sm:$0xf]
    %v2180 = vld [vmem:[%s9 + $0x148] sm:$0xf]
    %v2181 = vld [vmem:[%s9 + $0x14c] sm:$0xf]
    %v2182 = vld [vmem:[%s9 + $0x150] sm:$0xf]
    %v2183 = vld [vmem:[%s9 + $0x154] sm:$0xf]
    %v2184 = vld [vmem:[%s9 + $0x158] sm:$0xf]
    %v2185 = vld [vmem:[%s9 + $0x15c] sm:$0xf]
    %v2186 = vld [vmem:[%s9 + $0x160] sm:$0xf]
    %v2187 = vld [vmem:[%s9 + $0x164] sm:$0xf]
    %v2188 = vld [vmem:[%s9 + $0x168] sm:$0xf]
    %v2189 = vld [vmem:[%s9 + $0x16c] sm:$0xf]
    %v2190 = vld [vmem:[%s9 + $0x170] sm:$0xf]
    %v2191 = vld [vmem:[%s9 + $0x174] sm:$0xf]
    %v2192 = vld [vmem:[%s9 + $0x178] sm:$0xf]
    %v2193 = vld [vmem:[%s9 + $0x17c] sm:$0xf]
    %v2210 = vunpack.c.l.b16 %v2178
    %v2211 = vunpack.c.l.b16 %v2179
    %v2212 = vunpack.c.l.b16 %v2180
    %v2213 = vunpack.c.l.b16 %v2181
    %v2214 = vunpack.c.l.b16 %v2182
    %v2215 = vunpack.c.l.b16 %v2183
    %v2216 = vunpack.c.l.b16 %v2184
    %v2217 = vunpack.c.l.b16 %v2185
    %v2218 = vunpack.c.l.b16 %v2186
    %v2219 = vunpack.c.l.b16 %v2187
    %v2220 = vunpack.c.l.b16 %v2188
    %v2221 = vunpack.c.l.b16 %v2189
    %v2222 = vunpack.c.l.b16 %v2190
    %v2223 = vunpack.c.l.b16 %v2191
    %v2224 = vunpack.c.l.b16 %v2192
    %v2225 = vunpack.c.l.b16 %v2193
    %v2226 = vpack.c.b16 %v2211, %v2210
    %v2227 = vpack.c.b16 %v2213, %v2212
    %v2228 = vpack.c.b16 %v2215, %v2214
    %v2229 = vpack.c.b16 %v2217, %v2216
    %v2230 = vpack.c.b16 %v2219, %v2218
    %v2231 = vpack.c.b16 %v2221, %v2220
    %v2232 = vpack.c.b16 %v2223, %v2222
    %v2233 = vpack.c.b16 %v2225, %v2224
    %2242 = vmatprep.subr.bf16.mxu0 0
    %2243 = vmatpush1.bf16.msra.mxu0 %v2226
    %2244 = vmatprep.subr.bf16.mxu0 0
    %2245 = vmatpush1.bf16.msra.mxu0 %v2227
    %2246 = vmatprep.subr.bf16.mxu0 0
    %2247 = vmatpush1.bf16.msra.mxu0 %v2228
    %2248 = vmatprep.subr.bf16.mxu0 0
    %2249 = vmatpush1.bf16.msra.mxu0 %v2229
    %2250 = vmatprep.subr.bf16.mxu0 0
    %2251 = vmatpush1.bf16.msra.mxu0 %v2230
    %2252 = vmatprep.subr.bf16.mxu0 0
    %2253 = vmatpush1.bf16.msra.mxu0 %v2231
    %2254 = vmatprep.subr.bf16.mxu0 0
    %2255 = vmatpush1.bf16.msra.mxu0 %v2232
    %2256 = vmatprep.subr.bf16.mxu0 0
    %2257 = vmatpush1.bf16.msra.mxu0 %v2233
    %2258 = vmatprep.subr.bf16.mxu0 0
    %2259 = vmatpush1.bf16.msra.mxu0 0
    %2260 = vmatprep.subr.bf16.mxu0 0
    %2261 = vmatpush1.bf16.msra.mxu0 0
    %2262 = vmatprep.subr.bf16.mxu0 0
    %2263 = vmatpush1.bf16.msra.mxu0 0
    %2264 = vmatprep.subr.bf16.mxu0 0
    %2265 = vmatpush1.bf16.msra.mxu0 0
    %2266 = vmatprep.subr.bf16.mxu0 0
    %2267 = vmatpush1.bf16.msra.mxu0 0
    %2268 = vmatprep.subr.bf16.mxu0 0
    %2269 = vmatpush1.bf16.msra.mxu0 0
    %2270 = vmatprep.subr.bf16.mxu0 0
    %2271 = vmatpush1.bf16.msra.mxu0 0
    %2272 = vmatprep.subr.bf16.mxu0 0
    %2273 = vmatpush1.bf16.msra.mxu0 0
    %2274 = vmatprep.mubr.bf16.mxu0 0
    %2275 = vmatmul.mubr.bf16.gmra.mrb[0].mxu0 %v2177
    %v2276 = vpop.f32.mrb[0].mxu0
    %v2277 = vadd.f32 0.0, %v2276
    %v2278 = vpop.f32.mrb[0].mxu0
    %v2279 = vpop.f32.mrb[0].mxu0
    %v2280 = vadd.f32 0.0, %v2279
    %v2281 = vpop.f32.mrb[0].mxu0
    %2282 = vdwg.mxu0
    %v2283 = vadd.f32 %v1997, %v2277
    %v2284 = vadd.f32 %v1998, %v2280
    %v2285 = vld [vmem:[%s7 + $0x18] sm:$0xf]
    %v2286 = vld [vmem:[%s7 + $0x34] sm:$0xf]
    %v2287 = vld [vmem:[%s7 + $0x50] sm:$0xf]
    %v2288 = vld [vmem:[%s7 + $0x6c] sm:$0xf]
    %v2289 = vld [vmem:[%s7 + $0x88] sm:$0xf]
    %v2290 = vld [vmem:[%s7 + $0xa4] sm:$0xf]
    %v2291 = vld [vmem:[%s7 + $0xc0] sm:$0xf]
    %v2292 = vld [vmem:[%s7 + $0xdc] sm:$0xf]
    %v2293 = vld [vmem:[%s7 + $0xf8] sm:$0xf]
    %v2294 = vld [vmem:[%s7 + $0x114] sm:$0xf]
    %v2295 = vld [vmem:[%s7 + $0x130] sm:$0xf]
    %v2296 = vld [vmem:[%s7 + $0x14c] sm:$0xf]
    %v2297 = vld [vmem:[%s7 + $0x168] sm:$0xf]
    %v2298 = vld [vmem:[%s7 + $0x184] sm:$0xf]
    %v2299 = vld [vmem:[%s7 + $0x1a0] sm:$0xf]
    %v2300 = vld [vmem:[%s7 + $0x1bc] sm:$0xf]
    %v2301 = vld [vmem:[%s7 + $0x1d8] sm:$0xf]
    %v2302 = vld [vmem:[%s7 + $0x1f4] sm:$0xf]
    %v2303 = vld [vmem:[%s7 + $0x210] sm:$0xf]
    %v2304 = vld [vmem:[%s7 + $0x22c] sm:$0xf]
    %v2305 = vld [vmem:[%s7 + $0x248] sm:$0xf]
    %v2306 = vld [vmem:[%s7 + $0x264] sm:$0xf]
    %v2307 = vld [vmem:[%s7 + $0x280] sm:$0xf]
    %v2308 = vld [vmem:[%s7 + $0x29c] sm:$0xf]
    %v2309 = vld [vmem:[%s7 + $0x2b8] sm:$0xf]
    %v2310 = vld [vmem:[%s7 + $0x2d4] sm:$0xf]
    %v2311 = vld [vmem:[%s7 + $0x2f0] sm:$0xf]
    %v2312 = vld [vmem:[%s7 + $0x30c] sm:$0xf]
    %v2313 = vld [vmem:[%s7 + $0x328] sm:$0xf]
    %v2314 = vld [vmem:[%s7 + $0x344] sm:$0xf]
    %v2315 = vld [vmem:[%s7 + $0x360] sm:$0xf]
    %v2316 = vld [vmem:[%s7 + $0x37c] sm:$0xf]
    %v2317 = vld [vmem:[%s8 + $0x6] sm:$0x1]
    %v2319 = vlaneseq
    %v2320 = vshrl.u32 %v2319, 7
    %v2321 = vsub.s32 0, %v2320
    %v2322 = vrot.slane %v2317, %v2321
    %v2356 = vunpack.c.l.b16 %v2285
    %v2357 = vunpack.c.l.b16 %v2286
    %v2358 = vunpack.c.l.b16 %v2287
    %v2359 = vunpack.c.l.b16 %v2288
    %v2360 = vunpack.c.l.b16 %v2289
    %v2361 = vunpack.c.l.b16 %v2290
    %v2362 = vunpack.c.l.b16 %v2291
    %v2363 = vunpack.c.l.b16 %v2292
    %v2364 = vunpack.c.l.b16 %v2293
    %v2365 = vunpack.c.l.b16 %v2294
    %v2366 = vunpack.c.l.b16 %v2295
    %v2367 = vunpack.c.l.b16 %v2296
    %v2368 = vunpack.c.l.b16 %v2297
    %v2369 = vunpack.c.l.b16 %v2298
    %v2370 = vunpack.c.l.b16 %v2299
    %v2371 = vunpack.c.l.b16 %v2300
    %v2372 = vunpack.c.l.b16 %v2301
    %v2373 = vunpack.c.l.b16 %v2302
    %v2374 = vunpack.c.l.b16 %v2303
    %v2375 = vunpack.c.l.b16 %v2304
    %v2376 = vunpack.c.l.b16 %v2305
    %v2377 = vunpack.c.l.b16 %v2306
    %v2378 = vunpack.c.l.b16 %v2307
    %v2379 = vunpack.c.l.b16 %v2308
    %v2380 = vunpack.c.l.b16 %v2309
    %v2381 = vunpack.c.l.b16 %v2310
    %v2382 = vunpack.c.l.b16 %v2311
    %v2383 = vunpack.c.l.b16 %v2312
    %v2384 = vunpack.c.l.b16 %v2313
    %v2385 = vunpack.c.l.b16 %v2314
    %v2386 = vunpack.c.l.b16 %v2315
    %v2387 = vunpack.c.l.b16 %v2316
    %v2388 = vpack.c.b16 %v2357, %v2356
    %v2389 = vpack.c.b16 %v2359, %v2358
    %v2390 = vpack.c.b16 %v2361, %v2360
    %v2391 = vpack.c.b16 %v2363, %v2362
    %v2392 = vpack.c.b16 %v2365, %v2364
    %v2393 = vpack.c.b16 %v2367, %v2366
    %v2394 = vpack.c.b16 %v2369, %v2368
    %v2395 = vpack.c.b16 %v2371, %v2370
    %v2396 = vpack.c.b16 %v2373, %v2372
    %v2397 = vpack.c.b16 %v2375, %v2374
    %v2398 = vpack.c.b16 %v2377, %v2376
    %v2399 = vpack.c.b16 %v2379, %v2378
    %v2400 = vpack.c.b16 %v2381, %v2380
    %v2401 = vpack.c.b16 %v2383, %v2382
    %v2402 = vpack.c.b16 %v2385, %v2384
    %v2403 = vpack.c.b16 %v2387, %v2386
    %2420 = vmatprep.subr.bf16.mxu0 0
    %2421 = vmatpush1.bf16.msra.mxu0 %v2388
    %2422 = vmatprep.subr.bf16.mxu0 0
    %2423 = vmatpush1.bf16.msra.mxu0 %v2389
    %2424 = vmatprep.subr.bf16.mxu0 0
    %2425 = vmatpush1.bf16.msra.mxu0 %v2390
    %2426 = vmatprep.subr.bf16.mxu0 0
    %2427 = vmatpush1.bf16.msra.mxu0 %v2391
    %2428 = vmatprep.subr.bf16.mxu0 0
    %2429 = vmatpush1.bf16.msra.mxu0 %v2392
    %2430 = vmatprep.subr.bf16.mxu0 0
    %2431 = vmatpush1.bf16.msra.mxu0 %v2393
    %2432 = vmatprep.subr.bf16.mxu0 0
    %2433 = vmatpush1.bf16.msra.mxu0 %v2394
    %2434 = vmatprep.subr.bf16.mxu0 0
    %2435 = vmatpush1.bf16.msra.mxu0 %v2395
    %2436 = vmatprep.subr.bf16.mxu0 0
    %2437 = vmatpush1.bf16.msra.mxu0 %v2396
    %2438 = vmatprep.subr.bf16.mxu0 0
    %2439 = vmatpush1.bf16.msra.mxu0 %v2397
    %2440 = vmatprep.subr.bf16.mxu0 0
    %2441 = vmatpush1.bf16.msra.mxu0 %v2398
    %2442 = vmatprep.subr.bf16.mxu0 0
    %2443 = vmatpush1.bf16.msra.mxu0 %v2399
    %2444 = vmatprep.subr.bf16.mxu0 0
    %2445 = vmatpush1.bf16.msra.mxu0 %v2400
    %2446 = vmatprep.subr.bf16.mxu0 0
    %2447 = vmatpush1.bf16.msra.mxu0 %v2401
    %2448 = vmatprep.subr.bf16.mxu0 0
    %2449 = vmatpush1.bf16.msra.mxu0 %v2402
    %2450 = vmatprep.subr.bf16.mxu0 0
    %2451 = vmatpush1.bf16.msra.mxu0 %v2403
    %2452 = vmatprep.mubr.bf16.mxu0 %v572
    %2453 = vmatmul.mubr.bf16.gmra.mrb[0].mxu0 %v571
    %v2454 = vpop.f32.mrb[0].mxu0
    %v2455 = vadd.f32 %v2322, %v2454
    %v2456 = vpop.f32.mrb[0].mxu0
    %v2457 = vpop.f32.mrb[0].mxu0
    %v2458 = vadd.f32 %v2322, %v2457
    %v2459 = vpop.f32.mrb[0].mxu0
    %2460 = vdwg.mxu0
    %v2461 = vmax.f32 %v2455, 0.0
    %v2462 = vmax.f32 %v2458, 0.0
    %v2463 = vpack.c.bf16 %v2462, %v2461
    %v2464 = vld [vmem:[%s9 + $0x180] sm:$0xf]
    %v2465 = vld [vmem:[%s9 + $0x184] sm:$0xf]
    %v2466 = vld [vmem:[%s9 + $0x188] sm:$0xf]
    %v2467 = vld [vmem:[%s9 + $0x18c] sm:$0xf]
    %v2468 = vld [vmem:[%s9 + $0x190] sm:$0xf]
    %v2469 = vld [vmem:[%s9 + $0x194] sm:$0xf]
    %v2470 = vld [vmem:[%s9 + $0x198] sm:$0xf]
    %v2471 = vld [vmem:[%s9 + $0x19c] sm:$0xf]
    %v2472 = vld [vmem:[%s9 + $0x1a0] sm:$0xf]
    %v2473 = vld [vmem:[%s9 + $0x1a4] sm:$0xf]
    %v2474 = vld [vmem:[%s9 + $0x1a8] sm:$0xf]
    %v2475 = vld [vmem:[%s9 + $0x1ac] sm:$0xf]
    %v2476 = vld [vmem:[%s9 + $0x1b0] sm:$0xf]
    %v2477 = vld [vmem:[%s9 + $0x1b4] sm:$0xf]
    %v2478 = vld [vmem:[%s9 + $0x1b8] sm:$0xf]
    %v2479 = vld [vmem:[%s9 + $0x1bc] sm:$0xf]
    %v2496 = vunpack.c.l.b16 %v2464
    %v2497 = vunpack.c.l.b16 %v2465
    %v2498 = vunpack.c.l.b16 %v2466
    %v2499 = vunpack.c.l.b16 %v2467
    %v2500 = vunpack.c.l.b16 %v2468
    %v2501 = vunpack.c.l.b16 %v2469
    %v2502 = vunpack.c.l.b16 %v2470
    %v2503 = vunpack.c.l.b16 %v2471
    %v2504 = vunpack.c.l.b16 %v2472
    %v2505 = vunpack.c.l.b16 %v2473
    %v2506 = vunpack.c.l.b16 %v2474
    %v2507 = vunpack.c.l.b16 %v2475
    %v2508 = vunpack.c.l.b16 %v2476
    %v2509 = vunpack.c.l.b16 %v2477
    %v2510 = vunpack.c.l.b16 %v2478
    %v2511 = vunpack.c.l.b16 %v2479
    %v2512 = vpack.c.b16 %v2497, %v2496
    %v2513 = vpack.c.b16 %v2499, %v2498
    %v2514 = vpack.c.b16 %v2501, %v2500
    %v2515 = vpack.c.b16 %v2503, %v2502
    %v2516 = vpack.c.b16 %v2505, %v2504
    %v2517 = vpack.c.b16 %v2507, %v2506
    %v2518 = vpack.c.b16 %v2509, %v2508
    %v2519 = vpack.c.b16 %v2511, %v2510
    %2528 = vmatprep.subr.bf16.mxu0 0
    %2529 = vmatpush1.bf16.msra.mxu0 %v2512
    %2530 = vmatprep.subr.bf16.mxu0 0
    %2531 = vmatpush1.bf16.msra.mxu0 %v2513
    %2532 = vmatprep.subr.bf16.mxu0 0
    %2533 = vmatpush1.bf16.msra.mxu0 %v2514
    %2534 = vmatprep.subr.bf16.mxu0 0
    %2535 = vmatpush1.bf16.msra.mxu0 %v2515
    %2536 = vmatprep.subr.bf16.mxu0 0
    %2537 = vmatpush1.bf16.msra.mxu0 %v2516
    %2538 = vmatprep.subr.bf16.mxu0 0
    %2539 = vmatpush1.bf16.msra.mxu0 %v2517
    %2540 = vmatprep.subr.bf16.mxu0 0
    %2541 = vmatpush1.bf16.msra.mxu0 %v2518
    %2542 = vmatprep.subr.bf16.mxu0 0
    %2543 = vmatpush1.bf16.msra.mxu0 %v2519
    %2544 = vmatprep.subr.bf16.mxu0 0
    %2545 = vmatpush1.bf16.msra.mxu0 0
    %2546 = vmatprep.subr.bf16.mxu0 0
    %2547 = vmatpush1.bf16.msra.mxu0 0
    %2548 = vmatprep.subr.bf16.mxu0 0
    %2549 = vmatpush1.bf16.msra.mxu0 0
    %2550 = vmatprep.subr.bf16.mxu0 0
    %2551 = vmatpush1.bf16.msra.mxu0 0
    %2552 = vmatprep.subr.bf16.mxu0 0
    %2553 = vmatpush1.bf16.msra.mxu0 0
    %2554 = vmatprep.subr.bf16.mxu0 0
    %2555 = vmatpush1.bf16.msra.mxu0 0
    %2556 = vmatprep.subr.bf16.mxu0 0
    %2557 = vmatpush1.bf16.msra.mxu0 0
    %2558 = vmatprep.subr.bf16.mxu0 0
    %2559 = vmatpush1.bf16.msra.mxu0 0
    %2560 = vmatprep.mubr.bf16.mxu0 0
    %2561 = vmatmul.mubr.bf16.gmra.mrb[0].mxu0 %v2463
    %v2562 = vpop.f32.mrb[0].mxu0
    %v2563 = vadd.f32 0.0, %v2562
    %v2564 = vpop.f32.mrb[0].mxu0
    %v2565 = vpop.f32.mrb[0].mxu0
    %v2566 = vadd.f32 0.0, %v2565
    %v2567 = vpop.f32.mrb[0].mxu0
    %2568 = vdwg.mxu0
    %v2569 = vadd.f32 %v2283, %v2563
    %v2570 = vadd.f32 %v2284, %v2566
    %v2571 = vld [vmem:[%s10] sm:$0x1]
    %v2573 = vlaneseq
    %v2574 = vshrl.u32 %v2573, 7
    %v2575 = vsub.s32 0, %v2574
    %v2576 = vrot.slane %v2571, %v2575
    %v2578 = vadd.f32 %v2569, %v2576
    %v2579 = vadd.f32 %v2570, %v2576
    %v2580 = vsub.f32 0.0, %v2578
    %v2581 = vsub.f32 0.0, %v2579
    %v2582 = vmul.f32 %v2580, 1.442695
    %v2583 = vpow.pop %v2582
    %v2584 = vmul.f32 %v2581, 1.442695
    %v2585 = vpow.pop %v2584
    %v2586 = vadd.f32 %v2583, 1.0
    %v2587 = vadd.f32 %v2585, 1.0
    %v2588 = vrcp.pop %v2586
    %v2589 = vrcp.pop %v2587
    %2590 = vst [vmem:[#allocation2] sm:$0xff] %v2588
    %2591 = vst [vmem:[#allocation2 + $0x8] sm:$0xff] %v2589
    // Predicated region
    $region46: #{_gmmn_forward_impl.1} parent=1 // pred_check
      _
    $region47: #{_gmmn_forward_impl.1} parent=1 // pred_check_branch
      %2593 = sbr.rel (0) target = $region49
    $region48: #{_gmmn_forward_impl.1} parent=1 // pred_region
      %s2595 = ssub.s32 256, 256
      %2596 = vsyncadd [#allocation3], %s2595
      %s2597 = sshll.u32 [#allocation2], 4
      %s2598 = int_to_ptr.vmem [resolvable:$true] %s2597
      %2603 = dma.vmem_to_hbm [thread:$0]  %s2598, 256, %s11, [#allocation3], 128, 128, 8
    $region49: #{_gmmn_forward_impl.1} parent=1 // pred_fallthru
      _
    // Predicated region
    $region50: #{_gmmn_forward_impl.1} parent=1 // pred_check
      _
    $region51: #{_gmmn_forward_impl.1} parent=1 // pred_check_branch
      %2605 = sbr.rel (0) target = $region53
    $region52: #{_gmmn_forward_impl.1} parent=1 // pred_region
      %2606 = dma.done [#allocation3], 256
    $region53: #{_gmmn_forward_impl.1} parent=1 // pred_fallthru
      _
    %2607 = vsyncpa [#allocation3], 1

</llo_original>
